<compile_context>
chip_gen: v6e
topology: v6e:2x2x1
jax: 0.10.0
libtpu: 0.0.40
codegen_flags: <defaults>
</compile_context>

<pallas_src>
import functools

import jax
import jax.numpy as jnp
from jax.experimental import pallas as pl
from jax.experimental.pallas import tpu as pltpu

EPS = 1e-5  # nn.BatchNorm2d default eps

# 3x3 tap offsets, (dy, dx) major order — must match weight / mask packing.
_OFFSETS = tuple((sy, sx) for sy in (-1, 0, 1) for sx in (-1, 0, 1))


def _r8(v):
    return -(-v // 8) * 8


# ----------------------------------------------------------------------------
# Fused C3 kernel (one grid step = one image)
# ----------------------------------------------------------------------------
def _make_c3_kernel(n, c_, c2, H, W, pad, compute_dtype):
    HW = H * W
    f32 = jnp.float32
    # static offsets into the packed bias table (segments padded to 8 rows)
    sz12, szc = _r8(2 * c_), _r8(c_)
    om = sz12
    o3 = sz12 + n * 2 * szc

    def silu_bias(y, b):
        # BN scale already folded into the weights; epilogue = bias + SiLU,
        # kept in f32 (v5e has no bf16 VPU/EUP).
        y = y + b
        return y * jax.nn.sigmoid(y)

    def kernel(mask_ref, x_ref, w12_ref, wm1_ref, wm2_ref, w3_ref, bias_ref,
               o_ref, tpad_ref):
        cd = compute_dtype

        # ---- cv1 + cv2 fused: one (2c_, c1) @ (c1, HW) matmul ---------------
        x = x_ref[0].astype(cd)                       # cast in VMEM, not host
        y12 = jnp.dot(w12_ref[...], x, preferred_element_type=f32)
        y12 = silu_bias(y12, bias_ref[0:2 * c_, :])   # (2c_, HW) f32
        y = y12[:c_, :]                               # running m-branch act
        y2 = y12[c_:, :]                              # cv2 branch (for cv3)

        # Zero ONLY the halo strips (interior is overwritten every block).
        zeros_strip = jnp.zeros((c_, pad), cd)
        tpad_ref[:, :pad] = zeros_strip
        tpad_ref[:, pad + HW:] = zeros_strip

        mask = mask_ref[...]                          # (9, HW) cd, hoisted

        # ---- n x Bottleneck(c_, c_, shortcut, k=((1,1),(3,3)), e=1.0) -------
        for i in range(n):
            b1 = bias_ref[om + 2 * i * szc: om + 2 * i * szc + c_, :]
            b2 = bias_ref[om + 2 * i * szc + szc: om + 2 * i * szc + szc + c_, :]

            # Bottleneck.cv1: 1x1 conv
            t = jnp.dot(wm1_ref[i], y.astype(cd), preferred_element_type=f32)
            t = silu_bias(t, b1)                      # (c_, HW) f32

            # Bottleneck.cv2: 3x3 'same' conv as 9 accumulating K=c_ matmuls
            # on shifted views of the halo-padded activation (no im2col slab).
            tpad_ref[:, pad:pad + HW] = t.astype(cd)
            y3 = None
            for j, (sy, sx) in enumerate(_OFFSETS):
                s = sy * W + sx
                tap = tpad_ref[:, pad + s: pad + s + HW]
                if not (sy == 0 and sx == 0):         # center tap needs no mask
                    tap = tap * mask[j:j + 1, :]
                d = jnp.dot(wm2_ref[i, j], tap, preferred_element_type=f32)
                y3 = d if y3 is None else y3 + d
            y3 = silu_bias(y3, b2)
            y = y + y3                                # shortcut (c1 == c2)

        # ---- cv3 on the (virtual) channel concat [y ; y2] -------------------
        b3 = bias_ref[o3:o3 + c2, :]
        if c_ % 8 == 0:
            # single K=2c_ matmul: full MXU contraction depth on v6e/v7x.
            ycat = jnp.concatenate([y, y2], axis=0).astype(cd)
            out = jnp.dot(w3_ref[...], ycat, preferred_element_type=f32)
        else:
            # tiny unaligned c_ (toy shapes): keep the safe split form.
            out = (jnp.dot(w3_ref[:, :c_], y.astype(cd),
                           preferred_element_type=f32)
                   + jnp.dot(w3_ref[:, c_:], y2.astype(cd),
                             preferred_element_type=f32))
        out = silu_bias(out, b3)
        o_ref[0] = out.astype(o_ref.dtype)            # (c2, HW) lane-dense

    return kernel


def _const_spec(shape):
    return pl.BlockSpec(shape, lambda b: (0,) * len(shape))  # VMEM-resident


# ----------------------------------------------------------------------------
# Wrapper: parameter packing (BN scale folded into weights) + pallas_call
# ----------------------------------------------------------------------------
@functools.partial(jax.jit, static_argnames=("n", "compute_dtype"))
def c3_forward_pallas(x_nchw, params, n=1, compute_dtype=jnp.bfloat16):
    """C3 forward.  x_nchw: (N, c1, H, W) f32  ->  (N, c2, H, W) f32."""
    N, c1, H, W = x_nchw.shape
    HW = H * W
    c_ = int(params['cv1']['w'].shape[0])
    c2 = int(params['cv3']['w'].shape[0])
    cd = compute_dtype
    pad = max(128, ((W + 1 + 127) // 128) * 128)      # lane-aligned halo

    def fold1x1(p):   # (Cout, Cin, 1, 1) -> scale-folded (Cout, Cin)
        cout, cin = p['w'].shape[:2]
        return p['scale'][:, None] * p['w'].reshape(cout, cin)

    # cv1 & cv2 share their input -> one stacked folded weight (2c_, c1)
    w12 = jnp.concatenate([fold1x1(params['cv1']),
                           fold1x1(params['cv2'])], 0).astype(cd)
    # Bottleneck weights packed: (n, c_, c_) and (n, 9, c_, c_), tap-major
    # order matching _OFFSETS, BN scale folded along cout.
    wm1 = jnp.stack([fold1x1(p1) for (p1, _) in params['m']], 0).astype(cd)
    wm2 = jnp.stack(
        [p2['scale'][None, :, None]
         * p2['w'].transpose(2, 3, 0, 1).reshape(9, c_, c_)
         for (_, p2) in params['m']], 0).astype(cd)
    w3 = fold1x1(params['cv3']).astype(cd)

    # All per-channel biases in ONE packed column (8-row aligned segments).
    def pad8(v):
        r = (-v.shape[0]) % 8
        return jnp.pad(v, ((0, r),)) if r else v
    biases = [pad8(jnp.concatenate([params['cv1']['bias'],
                                    params['cv2']['bias']]))]
    for (p1, p2) in params['m']:
        biases += [pad8(p1['bias']), pad8(p2['bias'])]
    biases.append(pad8(params['cv3']['bias']))
    bias_all = jnp.concatenate(biases).reshape(-1, 1).astype(jnp.float32)

    # Border-validity masks for the 9 taps of the 3x3 'same' conv.
    hh = jnp.arange(H).reshape(H, 1)
    ww = jnp.arange(W).reshape(1, W)
    mask = jnp.stack(
        [((hh + sy >= 0) & (hh + sy < H) & (ww + sx >= 0) & (ww + sx < W)
          ).reshape(HW) for sy, sx in _OFFSETS], 0).astype(cd)

    # NCHW is already channels-major: reshape to (N, C, H*W) is free; the
    # bf16 cast happens inside the kernel (no extra HBM pass).
    x3 = x_nchw.reshape(N, c1, HW)

    out = pl.pallas_call(
        _make_c3_kernel(n, c_, c2, H, W, pad, cd),
        out_shape=jax.ShapeDtypeStruct((N, c2, HW), jnp.float32),
        grid=(N,),                                    # one image per step
        in_specs=[
            _const_spec((9, HW)),                     # tap masks
            pl.BlockSpec((1, c1, HW), lambda b: (b, 0, 0)),
            _const_spec((2 * c_, c1)),                # w12
            _const_spec((n, c_, c_)),                 # bottleneck 1x1 weights
            _const_spec((n, 9, c_, c_)),              # bottleneck 3x3 weights
            _const_spec((c2, 2 * c_)),                # w3
            _const_spec((int(bias_all.shape[0]), 1)), # packed biases
        ],
        out_specs=pl.BlockSpec((1, c2, HW), lambda b: (b, 0, 0)),
        scratch_shapes=[
            pltpu.VMEM((c_, HW + 2 * pad), cd),       # halo-padded activation
        ],
        compiler_params=pltpu.CompilerParams(
            dimension_semantics=("parallel",),        # v7x: 2 TCs over batch
            vmem_limit_bytes=64 * 1024 * 1024),
    )(mask, x3, w12, wm1, wm2, w3, bias_all)
    return out.reshape(N, c2, H, W)


# ----------------------------------------------------------------------------
# Parameters (deterministic, synthetic) and pure-JAX f32 reference
# ----------------------------------------------------------------------------
def make_conv_params(key, cin, cout, k):
    kw, kg, kb, km, kv = jax.random.split(key, 5)
    w = jax.random.normal(kw, (cout, cin, k, k), jnp.float32) / jnp.sqrt(cin * k * k)
    gamma = 1.0 + 0.1 * jax.random.normal(kg, (cout,), jnp.float32)
    beta = 0.1 * jax.random.normal(kb, (cout,), jnp.float32)
    rmean = 0.1 * jax.random.normal(km, (cout,), jnp.float32)
    rvar = jnp.abs(1.0 + 0.1 * jax.random.normal(kv, (cout,), jnp.float32)) + 0.5
    scale = gamma / jnp.sqrt(rvar + EPS)              # BN folded (eval mode)
    bias = beta - rmean * scale
    return {'w': w, 'scale': scale, 'bias': bias, 'k': k}


def _ref_conv_bn_silu(x, p):
    padw = p['k'] // 2
    y = jax.lax.conv_general_dilated(
        x, p['w'], (1, 1), [(padw, padw), (padw, padw)],
        dimension_numbers=('NCHW', 'OIHW', 'NCHW'))
    y = y * p['scale'][None, :, None, None] + p['bias'][None, :, None, None]
    return y * jax.nn.sigmoid(y)


def c3_forward_ref(x, P, n=1):
    y1 = _ref_conv_bn_silu(x, P['cv1'])
    y2 = _ref_conv_bn_silu(x, P['cv2'])
    y = y1
    for i in range(n):
        p1, p2 = P['m'][i]
        y = y + _ref_conv_bn_silu(_ref_conv_bn_silu(y, p1), p2)
    return _ref_conv_bn_silu(jnp.concatenate([y, y2], axis=1), P['cv3'])


# ----------------------------------------------------------------------------
if __name__ == "__main__":
    keys = jax.random.split(jax.random.PRNGKey(0), 16)

    # ---- test 1: C3(c1=8, c2=8, n=1, e=0.5) -> c_=4 (split-cv3 path) --------
    c1, c2, n, e = 8, 8, 1, 0.5
    c_ = int(c2 * e)
    N, H, W = 2, 16, 16
    x = jax.random.normal(keys[0], (N, c1, H, W), jnp.float32)
    P = {
        'cv1': make_conv_params(keys[1], c1, c_, 1),
        'cv2': make_conv_params(keys[2], c1, c_, 1),
        'cv3': make_conv_params(keys[3], 2 * c_, c2, 1),
        'm': [(make_conv_params(keys[4], c_, c_, 1),   # Bottleneck.cv1 (1x1)
               make_conv_params(keys[5], c_, c_, 3))], # Bottleneck.cv2 (3x3)
    }
    ref = c3_forward_ref(x, P, n=n)

    out_f32 = jax.block_until_ready(
        c3_forward_pallas(x, P, n=n, compute_dtype=jnp.float32))
    assert out_f32.shape == (N, c2, H, W), out_f32.shape
    err32 = float(jnp.max(jnp.abs(out_f32 - ref)))
    assert jnp.allclose(out_f32, ref, rtol=1e-2, atol=1e-2), f"f32 max err {err32}"

    out_bf16 = jax.block_until_ready(
        c3_forward_pallas(x, P, n=n, compute_dtype=jnp.bfloat16))
    errbf = float(jnp.max(jnp.abs(out_bf16 - ref)))
    assert jnp.allclose(out_bf16, ref, rtol=6e-2, atol=6e-2), f"bf16 max err {errbf}"

    # ---- test 2: C3(c1=32, c2=32, n=2, e=0.5) -> c_=16 (merged K=2c_ cv3) ---
    c1b, c2b, nb = 32, 32, 2
    c_b = int(c2b * 0.5)
    x2 = jax.random.normal(keys[6], (N, c1b, H, W), jnp.float32)
    P2 = {
        'cv1': make_conv_params(keys[7], c1b, c_b, 1),
        'cv2': make_conv_params(keys[8], c1b, c_b, 1),
        'cv3': make_conv_params(keys[9], 2 * c_b, c2b, 1),
        'm': [(make_conv_params(keys[10], c_b, c_b, 1),
               make_conv_params(keys[11], c_b, c_b, 3)),
              (make_conv_params(keys[12], c_b, c_b, 1),
               make_conv_params(keys[13], c_b, c_b, 3))],
    }
    ref2 = c3_forward_ref(x2, P2, n=nb)
    out2 = jax.block_until_ready(
        c3_forward_pallas(x2, P2, n=nb, compute_dtype=jnp.float32))
    err2 = float(jnp.max(jnp.abs(out2 - ref2)))
    assert jnp.allclose(out2, ref2, rtol=1e-2, atol=1e-2), f"test2 f32 max err {err2}"

    print("KERNEL_OK")
</pallas_src>

<mosaic_0001>
module attributes {stable_mosaic.version = 11 : i64} {
  func.func @kernel(%arg0: i32, %arg1: memref<9x256xf32, #tpu.memory_space<vmem>>, %arg2: memref<1x8x256xf32, #tpu.memory_space<vmem>>, %arg3: memref<8x8xf32, #tpu.memory_space<vmem>>, %arg4: memref<1x4x4xf32, #tpu.memory_space<vmem>>, %arg5: memref<1x9x4x4xf32, #tpu.memory_space<vmem>>, %arg6: memref<8x8xf32, #tpu.memory_space<vmem>>, %arg7: memref<32x1xf32, #tpu.memory_space<vmem>>, %arg8: memref<1x8x256xf32, #tpu.memory_space<vmem>>, %arg9: memref<4x512xf32, #tpu.memory_space<vmem>>) attributes {dimension_semantics = [#tpu.dimension_semantics<parallel>], iteration_bounds = array<i64: 2>, scalar_prefetch = 0 : i64, scratch_operands = 1 : i64, tpu.core_type = #tpu.core_type<tc>, window_params = [{pipeline_mode = #tpu.pipeline_mode<synchronous>, transform_indices = @transform_0, window_bounds = array<i64: 9, 256>}, {transform_indices = @transform_1, window_bounds = array<i64: 1, 8, 256>}, {pipeline_mode = #tpu.pipeline_mode<synchronous>, transform_indices = @transform_2, window_bounds = array<i64: 8, 8>}, {pipeline_mode = #tpu.pipeline_mode<synchronous>, transform_indices = @transform_3, window_bounds = array<i64: 1, 4, 4>}, {pipeline_mode = #tpu.pipeline_mode<synchronous>, transform_indices = @transform_4, window_bounds = array<i64: 1, 9, 4, 4>}, {pipeline_mode = #tpu.pipeline_mode<synchronous>, transform_indices = @transform_5, window_bounds = array<i64: 8, 8>}, {pipeline_mode = #tpu.pipeline_mode<synchronous>, transform_indices = @transform_6, window_bounds = array<i64: 32, 1>}, {transform_indices = @transform_7, window_bounds = array<i64: 1, 8, 256>}]} {
    %c0 = arith.constant 0 : index
    %c0_0 = arith.constant 0 : index
    %c0_1 = arith.constant 0 : index
    %0 = vector.load %arg2[%c0, %c0_0, %c0_1] : memref<1x8x256xf32, #tpu.memory_space<vmem>>, vector<1x8x256xf32>
    %1 = vector.shape_cast %0 : vector<1x8x256xf32> to vector<8x256xf32>
    %c0_2 = arith.constant 0 : index
    %c0_3 = arith.constant 0 : index
    %2 = vector.load %arg3[%c0_2, %c0_3] : memref<8x8xf32, #tpu.memory_space<vmem>>, vector<8x8xf32>
    %cst = arith.constant dense<0.000000e+00> : vector<8x256xf32>
    %3 = tpu.matmul %2, %1, %cst {dimension_numbers = #tpu.dot_dimension_numbers<[1], [0], [0], [1], [0, 0, 1, 1], [], []>} : vector<8x8xf32>, vector<8x256xf32>, vector<8x256xf32> -> vector<8x256xf32>
    %c0_4 = arith.constant 0 : index
    %c0_5 = arith.constant 0 : index
    %4 = vector.load %arg7[%c0_4, %c0_5] : memref<32x1xf32, #tpu.memory_space<vmem>>, vector<8x1xf32>
    %5 = vector.broadcast %4 : vector<8x1xf32> to vector<8x256xf32>
    %6 = arith.addf %3, %5 : vector<8x256xf32>
    %7 = arith.negf %6 : vector<8x256xf32>
    %8 = math.exp %7 : vector<8x256xf32>
    %cst_6 = arith.constant 1.000000e+00 : f32
    %9 = vector.broadcast %cst_6 : f32 to vector<8x256xf32>
    %10 = arith.addf %9, %8 : vector<8x256xf32>
    %11 = arith.divf %9, %10 : vector<8x256xf32>
    %12 = arith.mulf %6, %11 : vector<8x256xf32>
    %13 = vector.extract_strided_slice %12 {offsets = [0, 0], sizes = [4, 256], strides = [1, 1]} : vector<8x256xf32> to vector<4x256xf32>
    %14 = vector.extract_strided_slice %12 {offsets = [4, 0], sizes = [4, 256], strides = [1, 1]} : vector<8x256xf32> to vector<4x256xf32>
    %cst_7 = arith.constant 0.000000e+00 : f32
    %15 = vector.broadcast %cst_7 : f32 to vector<4x128xf32>
    %c0_8 = arith.constant 0 : index
    %c0_9 = arith.constant 0 : index
    %16 = vector.load %arg9[%c0_8, %c0_9] : memref<4x512xf32, #tpu.memory_space<vmem>>, vector<4x128xf32>
    tpu.vector_store %arg9[%c0_8, %c0_9], %15 {strides = array<i32>} : memref<4x512xf32, #tpu.memory_space<vmem>>, vector<4x128xf32>,
    %c0_10 = arith.constant 0 : index
    %c384 = arith.constant 384 : index
    %17 = vector.load %arg9[%c0_10, %c384] : memref<4x512xf32, #tpu.memory_space<vmem>>, vector<4x128xf32>
    tpu.vector_store %arg9[%c0_10, %c384], %15 {strides = array<i32>} : memref<4x512xf32, #tpu.memory_space<vmem>>, vector<4x128xf32>,
    %c0_11 = arith.constant 0 : index
    %c0_12 = arith.constant 0 : index
    %18 = vector.load %arg1[%c0_11, %c0_12] : memref<9x256xf32, #tpu.memory_space<vmem>>, vector<9x256xf32>
    %c8 = arith.constant 8 : index
    %c0_13 = arith.constant 0 : index
    %19 = vector.load %arg7[%c8, %c0_13] : memref<32x1xf32, #tpu.memory_space<vmem>>, vector<4x1xf32>
    %c16 = arith.constant 16 : index
    %c0_14 = arith.constant 0 : index
    %20 = vector.load %arg7[%c16, %c0_14] : memref<32x1xf32, #tpu.memory_space<vmem>>, vector<4x1xf32>
    %c0_15 = arith.constant 0 : index
    %c0_16 = arith.constant 0 : index
    %c0_17 = arith.constant 0 : index
    %21 = vector.load %arg4[%c0_15, %c0_16, %c0_17] : memref<1x4x4xf32, #tpu.memory_space<vmem>>, vector<1x4x4xf32>
    %22 = vector.shape_cast %21 : vector<1x4x4xf32> to vector<4x4xf32>
    %cst_18 = arith.constant dense<0.000000e+00> : vector<4x256xf32>
    %23 = tpu.matmul %22, %13, %cst_18 {dimension_numbers = #tpu.dot_dimension_numbers<[1], [0], [0], [1], [0, 0, 1, 1], [], []>} : vector<4x4xf32>, vector<4x256xf32>, vector<4x256xf32> -> vector<4x256xf32>
    %24 = vector.broadcast %19 : vector<4x1xf32> to vector<4x256xf32>
    %25 = arith.addf %23, %24 : vector<4x256xf32>
    %26 = arith.negf %25 : vector<4x256xf32>
    %27 = math.exp %26 : vector<4x256xf32>
    %cst_19 = arith.constant 1.000000e+00 : f32
    %28 = vector.broadcast %cst_19 : f32 to vector<4x256xf32>
    %29 = arith.addf %28, %27 : vector<4x256xf32>
    %30 = arith.divf %28, %29 : vector<4x256xf32>
    %31 = arith.mulf %25, %30 : vector<4x256xf32>
    %c0_20 = arith.constant 0 : index
    %c128 = arith.constant 128 : index
    %32 = vector.load %arg9[%c0_20, %c128] : memref<4x512xf32, #tpu.memory_space<vmem>>, vector<4x256xf32>
    tpu.vector_store %arg9[%c0_20, %c128], %31 {strides = array<i32>} : memref<4x512xf32, #tpu.memory_space<vmem>>, vector<4x256xf32>,
    %c0_21 = arith.constant 0 : index
    %c111 = arith.constant 111 : index
    %33 = vector.load %arg9[%c0_21, %c111] : memref<4x512xf32, #tpu.memory_space<vmem>>, vector<4x256xf32>
    %34 = vector.extract_strided_slice %18 {offsets = [0, 0], sizes = [1, 256], strides = [1, 1]} : vector<9x256xf32> to vector<1x256xf32>
    %35 = vector.broadcast %34 : vector<1x256xf32> to vector<4x256xf32>
    %36 = arith.mulf %33, %35 : vector<4x256xf32>
    %c0_22 = arith.constant 0 : index
    %c0_23 = arith.constant 0 : index
    %c0_24 = arith.constant 0 : index
    %c0_25 = arith.constant 0 : index
    %37 = vector.load %arg5[%c0_22, %c0_23, %c0_24, %c0_25] : memref<1x9x4x4xf32, #tpu.memory_space<vmem>>, vector<1x1x4x4xf32>
    %38 = vector.shape_cast %37 : vector<1x1x4x4xf32> to vector<4x4xf32>
    %cst_26 = arith.constant dense<0.000000e+00> : vector<4x256xf32>
    %39 = tpu.matmul %38, %36, %cst_26 {dimension_numbers = #tpu.dot_dimension_numbers<[1], [0], [0], [1], [0, 0, 1, 1], [], []>} : vector<4x4xf32>, vector<4x256xf32>, vector<4x256xf32> -> vector<4x256xf32>
    %c0_27 = arith.constant 0 : index
    %c112 = arith.constant 112 : index
    %40 = vector.load %arg9[%c0_27, %c112] : memref<4x512xf32, #tpu.memory_space<vmem>>, vector<4x256xf32>
    %41 = vector.extract_strided_slice %18 {offsets = [1, 0], sizes = [1, 256], strides = [1, 1]} : vector<9x256xf32> to vector<1x256xf32>
    %42 = vector.broadcast %41 : vector<1x256xf32> to vector<4x256xf32>
    %43 = arith.mulf %40, %42 : vector<4x256xf32>
    %c0_28 = arith.constant 0 : index
    %c1 = arith.constant 1 : index
    %c0_29 = arith.constant 0 : index
    %c0_30 = arith.constant 0 : index
    %44 = vector.load %arg5[%c0_28, %c1, %c0_29, %c0_30] : memref<1x9x4x4xf32, #tpu.memory_space<vmem>>, vector<1x1x4x4xf32>
    %45 = vector.shape_cast %44 : vector<1x1x4x4xf32> to vector<4x4xf32>
    %cst_31 = arith.constant dense<0.000000e+00> : vector<4x256xf32>
    %46 = tpu.matmul %45, %43, %cst_31 {dimension_numbers = #tpu.dot_dimension_numbers<[1], [0], [0], [1], [0, 0, 1, 1], [], []>} : vector<4x4xf32>, vector<4x256xf32>, vector<4x256xf32> -> vector<4x256xf32>
    %47 = arith.addf %39, %46 : vector<4x256xf32>
    %c0_32 = arith.constant 0 : index
    %c113 = arith.constant 113 : index
    %48 = vector.load %arg9[%c0_32, %c113] : memref<4x512xf32, #tpu.memory_space<vmem>>, vector<4x256xf32>
    %49 = vector.extract_strided_slice %18 {offsets = [2, 0], sizes = [1, 256], strides = [1, 1]} : vector<9x256xf32> to vector<1x256xf32>
    %50 = vector.broadcast %49 : vector<1x256xf32> to vector<4x256xf32>
    %51 = arith.mulf %48, %50 : vector<4x256xf32>
    %c0_33 = arith.constant 0 : index
    %c2 = arith.constant 2 : index
    %c0_34 = arith.constant 0 : index
    %c0_35 = arith.constant 0 : index
    %52 = vector.load %arg5[%c0_33, %c2, %c0_34, %c0_35] : memref<1x9x4x4xf32, #tpu.memory_space<vmem>>, vector<1x1x4x4xf32>
    %53 = vector.shape_cast %52 : vector<1x1x4x4xf32> to vector<4x4xf32>
    %cst_36 = arith.constant dense<0.000000e+00> : vector<4x256xf32>
    %54 = tpu.matmul %53, %51, %cst_36 {dimension_numbers = #tpu.dot_dimension_numbers<[1], [0], [0], [1], [0, 0, 1, 1], [], []>} : vector<4x4xf32>, vector<4x256xf32>, vector<4x256xf32> -> vector<4x256xf32>
    %55 = arith.addf %47, %54 : vector<4x256xf32>
    %c0_37 = arith.constant 0 : index
    %c127 = arith.constant 127 : index
    %56 = vector.load %arg9[%c0_37, %c127] : memref<4x512xf32, #tpu.memory_space<vmem>>, vector<4x256xf32>
    %57 = vector.extract_strided_slice %18 {offsets = [3, 0], sizes = [1, 256], strides = [1, 1]} : vector<9x256xf32> to vector<1x256xf32>
    %58 = vector.broadcast %57 : vector<1x256xf32> to vector<4x256xf32>
    %59 = arith.mulf %56, %58 : vector<4x256xf32>
    %c0_38 = arith.constant 0 : index
    %c3 = arith.constant 3 : index
    %c0_39 = arith.constant 0 : index
    %c0_40 = arith.constant 0 : index
    %60 = vector.load %arg5[%c0_38, %c3, %c0_39, %c0_40] : memref<1x9x4x4xf32, #tpu.memory_space<vmem>>, vector<1x1x4x4xf32>
    %61 = vector.shape_cast %60 : vector<1x1x4x4xf32> to vector<4x4xf32>
    %cst_41 = arith.constant dense<0.000000e+00> : vector<4x256xf32>
    %62 = tpu.matmul %61, %59, %cst_41 {dimension_numbers = #tpu.dot_dimension_numbers<[1], [0], [0], [1], [0, 0, 1, 1], [], []>} : vector<4x4xf32>, vector<4x256xf32>, vector<4x256xf32> -> vector<4x256xf32>
    %63 = arith.addf %55, %62 : vector<4x256xf32>
    %c0_42 = arith.constant 0 : index
    %c128_43 = arith.constant 128 : index
    %64 = vector.load %arg9[%c0_42, %c128_43] : memref<4x512xf32, #tpu.memory_space<vmem>>, vector<4x256xf32>
    %c0_44 = arith.constant 0 : index
    %c4 = arith.constant 4 : index
    %c0_45 = arith.constant 0 : index
    %c0_46 = arith.constant 0 : index
    %65 = vector.load %arg5[%c0_44, %c4, %c0_45, %c0_46] : memref<1x9x4x4xf32, #tpu.memory_space<vmem>>, vector<1x1x4x4xf32>
    %66 = vector.shape_cast %65 : vector<1x1x4x4xf32> to vector<4x4xf32>
    %cst_47 = arith.constant dense<0.000000e+00> : vector<4x256xf32>
    %67 = tpu.matmul %66, %64, %cst_47 {dimension_numbers = #tpu.dot_dimension_numbers<[1], [0], [0], [1], [0, 0, 1, 1], [], []>} : vector<4x4xf32>, vector<4x256xf32>, vector<4x256xf32> -> vector<4x256xf32>
    %68 = arith.addf %63, %67 : vector<4x256xf32>
    %c0_48 = arith.constant 0 : index
    %c129 = arith.constant 129 : index
    %69 = vector.load %arg9[%c0_48, %c129] : memref<4x512xf32, #tpu.memory_space<vmem>>, vector<4x256xf32>
    %70 = vector.extract_strided_slice %18 {offsets = [5, 0], sizes = [1, 256], strides = [1, 1]} : vector<9x256xf32> to vector<1x256xf32>
    %71 = vector.broadcast %70 : vector<1x256xf32> to vector<4x256xf32>
    %72 = arith.mulf %69, %71 : vector<4x256xf32>
    %c0_49 = arith.constant 0 : index
    %c5 = arith.constant 5 : index
    %c0_50 = arith.constant 0 : index
    %c0_51 = arith.constant 0 : index
    %73 = vector.load %arg5[%c0_49, %c5, %c0_50, %c0_51] : memref<1x9x4x4xf32, #tpu.memory_space<vmem>>, vector<1x1x4x4xf32>
    %74 = vector.shape_cast %73 : vector<1x1x4x4xf32> to vector<4x4xf32>
    %cst_52 = arith.constant dense<0.000000e+00> : vector<4x256xf32>
    %75 = tpu.matmul %74, %72, %cst_52 {dimension_numbers = #tpu.dot_dimension_numbers<[1], [0], [0], [1], [0, 0, 1, 1], [], []>} : vector<4x4xf32>, vector<4x256xf32>, vector<4x256xf32> -> vector<4x256xf32>
    %76 = arith.addf %68, %75 : vector<4x256xf32>
    %c0_53 = arith.constant 0 : index
    %c143 = arith.constant 143 : index
    %77 = vector.load %arg9[%c0_53, %c143] : memref<4x512xf32, #tpu.memory_space<vmem>>, vector<4x256xf32>
    %78 = vector.extract_strided_slice %18 {offsets = [6, 0], sizes = [1, 256], strides = [1, 1]} : vector<9x256xf32> to vector<1x256xf32>
    %79 = vector.broadcast %78 : vector<1x256xf32> to vector<4x256xf32>
    %80 = arith.mulf %77, %79 : vector<4x256xf32>
    %c0_54 = arith.constant 0 : index
    %c6 = arith.constant 6 : index
    %c0_55 = arith.constant 0 : index
    %c0_56 = arith.constant 0 : index
    %81 = vector.load %arg5[%c0_54, %c6, %c0_55, %c0_56] : memref<1x9x4x4xf32, #tpu.memory_space<vmem>>, vector<1x1x4x4xf32>
    %82 = vector.shape_cast %81 : vector<1x1x4x4xf32> to vector<4x4xf32>
    %cst_57 = arith.constant dense<0.000000e+00> : vector<4x256xf32>
    %83 = tpu.matmul %82, %80, %cst_57 {dimension_numbers = #tpu.dot_dimension_numbers<[1], [0], [0], [1], [0, 0, 1, 1], [], []>} : vector<4x4xf32>, vector<4x256xf32>, vector<4x256xf32> -> vector<4x256xf32>
    %84 = arith.addf %76, %83 : vector<4x256xf32>
    %c0_58 = arith.constant 0 : index
    %c144 = arith.constant 144 : index
    %85 = vector.load %arg9[%c0_58, %c144] : memref<4x512xf32, #tpu.memory_space<vmem>>, vector<4x256xf32>
    %86 = vector.extract_strided_slice %18 {offsets = [7, 0], sizes = [1, 256], strides = [1, 1]} : vector<9x256xf32> to vector<1x256xf32>
    %87 = vector.broadcast %86 : vector<1x256xf32> to vector<4x256xf32>
    %88 = arith.mulf %85, %87 : vector<4x256xf32>
    %c0_59 = arith.constant 0 : index
    %c7 = arith.constant 7 : index
    %c0_60 = arith.constant 0 : index
    %c0_61 = arith.constant 0 : index
    %89 = vector.load %arg5[%c0_59, %c7, %c0_60, %c0_61] : memref<1x9x4x4xf32, #tpu.memory_space<vmem>>, vector<1x1x4x4xf32>
    %90 = vector.shape_cast %89 : vector<1x1x4x4xf32> to vector<4x4xf32>
    %cst_62 = arith.constant dense<0.000000e+00> : vector<4x256xf32>
    %91 = tpu.matmul %90, %88, %cst_62 {dimension_numbers = #tpu.dot_dimension_numbers<[1], [0], [0], [1], [0, 0, 1, 1], [], []>} : vector<4x4xf32>, vector<4x256xf32>, vector<4x256xf32> -> vector<4x256xf32>
    %92 = arith.addf %84, %91 : vector<4x256xf32>
    %c0_63 = arith.constant 0 : index
    %c145 = arith.constant 145 : index
    %93 = vector.load %arg9[%c0_63, %c145] : memref<4x512xf32, #tpu.memory_space<vmem>>, vector<4x256xf32>
    %94 = vector.extract_strided_slice %18 {offsets = [8, 0], sizes = [1, 256], strides = [1, 1]} : vector<9x256xf32> to vector<1x256xf32>
    %95 = vector.broadcast %94 : vector<1x256xf32> to vector<4x256xf32>
    %96 = arith.mulf %93, %95 : vector<4x256xf32>
    %c0_64 = arith.constant 0 : index
    %c8_65 = arith.constant 8 : index
    %c0_66 = arith.constant 0 : index
    %c0_67 = arith.constant 0 : index
    %97 = vector.load %arg5[%c0_64, %c8_65, %c0_66, %c0_67] : memref<1x9x4x4xf32, #tpu.memory_space<vmem>>, vector<1x1x4x4xf32>
    %98 = vector.shape_cast %97 : vector<1x1x4x4xf32> to vector<4x4xf32>
    %cst_68 = arith.constant dense<0.000000e+00> : vector<4x256xf32>
    %99 = tpu.matmul %98, %96, %cst_68 {dimension_numbers = #tpu.dot_dimension_numbers<[1], [0], [0], [1], [0, 0, 1, 1], [], []>} : vector<4x4xf32>, vector<4x256xf32>, vector<4x256xf32> -> vector<4x256xf32>
    %100 = arith.addf %92, %99 : vector<4x256xf32>
    %101 = vector.broadcast %20 : vector<4x1xf32> to vector<4x256xf32>
    %102 = arith.addf %100, %101 : vector<4x256xf32>
    %103 = arith.negf %102 : vector<4x256xf32>
    %104 = math.exp %103 : vector<4x256xf32>
    %cst_69 = arith.constant 1.000000e+00 : f32
    %105 = vector.broadcast %cst_69 : f32 to vector<4x256xf32>
    %106 = arith.addf %105, %104 : vector<4x256xf32>
    %107 = arith.divf %105, %106 : vector<4x256xf32>
    %108 = arith.mulf %102, %107 : vector<4x256xf32>
    %109 = arith.addf %13, %108 : vector<4x256xf32>
    %c24 = arith.constant 24 : index
    %c0_70 = arith.constant 0 : index
    %110 = vector.load %arg7[%c24, %c0_70] : memref<32x1xf32, #tpu.memory_space<vmem>>, vector<8x1xf32>
    %c0_71 = arith.constant 0 : index
    %c0_72 = arith.constant 0 : index
    %111 = vector.load %arg6[%c0_71, %c0_72] : memref<8x8xf32, #tpu.memory_space<vmem>>, vector<8x4xf32>
    %cst_73 = arith.constant dense<0.000000e+00> : vector<8x256xf32>
    %112 = tpu.matmul %111, %109, %cst_73 {dimension_numbers = #tpu.dot_dimension_numbers<[1], [0], [0], [1], [0, 0, 1, 1], [], []>} : vector<8x4xf32>, vector<4x256xf32>, vector<8x256xf32> -> vector<8x256xf32>
    %c0_74 = arith.constant 0 : index
    %c4_75 = arith.constant 4 : index
    %113 = vector.load %arg6[%c0_74, %c4_75] : memref<8x8xf32, #tpu.memory_space<vmem>>, vector<8x4xf32>
    %cst_76 = arith.constant dense<0.000000e+00> : vector<8x256xf32>
    %114 = tpu.matmul %113, %14, %cst_76 {dimension_numbers = #tpu.dot_dimension_numbers<[1], [0], [0], [1], [0, 0, 1, 1], [], []>} : vector<8x4xf32>, vector<4x256xf32>, vector<8x256xf32> -> vector<8x256xf32>
    %115 = arith.addf %112, %114 : vector<8x256xf32>
    %116 = vector.broadcast %110 : vector<8x1xf32> to vector<8x256xf32>
    %117 = arith.addf %115, %116 : vector<8x256xf32>
    %118 = arith.negf %117 : vector<8x256xf32>
    %119 = math.exp %118 : vector<8x256xf32>
    %cst_77 = arith.constant 1.000000e+00 : f32
    %120 = vector.broadcast %cst_77 : f32 to vector<8x256xf32>
    %121 = arith.addf %120, %119 : vector<8x256xf32>
    %122 = arith.divf %120, %121 : vector<8x256xf32>
    %123 = arith.mulf %117, %122 : vector<8x256xf32>
    %c0_78 = arith.constant 0 : index
    %c0_79 = arith.constant 0 : index
    %c0_80 = arith.constant 0 : index
    %124 = vector.load %arg8[%c0_78, %c0_79, %c0_80] : memref<1x8x256xf32, #tpu.memory_space<vmem>>, vector<1x8x256xf32>
    %125 = vector.shape_cast %124 : vector<1x8x256xf32> to vector<8x256xf32>
    %126 = vector.shape_cast %123 : vector<8x256xf32> to vector<1x8x256xf32>
    tpu.vector_store %arg8[%c0_78, %c0_79, %c0_80], %126 {strides = array<i32>} : memref<1x8x256xf32, #tpu.memory_space<vmem>>, vector<1x8x256xf32>,
    return
  }
  func.func @transform_0(%arg0: i32) -> (i32, i32) {
    %c0_i32 = arith.constant 0 : i32
    %c0_i32_0 = arith.constant 0 : i32
    %c0_i32_1 = arith.constant 0 : i32
    return %c0_i32, %c0_i32_0 : i32, i32
  }
  func.func @transform_1(%arg0: i32) -> (i32, i32, i32) {
    %c0_i32 = arith.constant 0 : i32
    %c0_i32_0 = arith.constant 0 : i32
    %c0_i32_1 = arith.constant 0 : i32
    return %arg0, %c0_i32, %c0_i32_0 : i32, i32, i32
  }
  func.func @transform_2(%arg0: i32) -> (i32, i32) {
    %c0_i32 = arith.constant 0 : i32
    %c0_i32_0 = arith.constant 0 : i32
    %c0_i32_1 = arith.constant 0 : i32
    return %c0_i32, %c0_i32_0 : i32, i32
  }
  func.func @transform_3(%arg0: i32) -> (i32, i32, i32) {
    %c0_i32 = arith.constant 0 : i32
    %c0_i32_0 = arith.constant 0 : i32
    %c0_i32_1 = arith.constant 0 : i32
    %c0_i32_2 = arith.constant 0 : i32
    return %c0_i32, %c0_i32_0, %c0_i32_1 : i32, i32, i32
  }
  func.func @transform_4(%arg0: i32) -> (i32, i32, i32, i32) {
    %c0_i32 = arith.constant 0 : i32
    %c0_i32_0 = arith.constant 0 : i32
    %c0_i32_1 = arith.constant 0 : i32
    %c0_i32_2 = arith.constant 0 : i32
    %c0_i32_3 = arith.constant 0 : i32
    return %c0_i32, %c0_i32_0, %c0_i32_1, %c0_i32_2 : i32, i32, i32, i32
  }
  func.func @transform_5(%arg0: i32) -> (i32, i32) {
    %c0_i32 = arith.constant 0 : i32
    %c0_i32_0 = arith.constant 0 : i32
    %c0_i32_1 = arith.constant 0 : i32
    return %c0_i32, %c0_i32_0 : i32, i32
  }
  func.func @transform_6(%arg0: i32) -> (i32, i32) {
    %c0_i32 = arith.constant 0 : i32
    %c0_i32_0 = arith.constant 0 : i32
    %c0_i32_1 = arith.constant 0 : i32
    return %c0_i32, %c0_i32_0 : i32, i32
  }
  func.func @transform_7(%arg0: i32) -> (i32, i32, i32) {
    %c0_i32 = arith.constant 0 : i32
    %c0_i32_0 = arith.constant 0 : i32
    %c0_i32_1 = arith.constant 0 : i32
    return %arg0, %c0_i32, %c0_i32_0 : i32, i32, i32
  }
}

</mosaic_0001>

<llo_original>
// kernel: c3_forward_pallas.1
$region0: #{c3_forward_pallas.1}
  #allocation0 [shape = 'u32[]', space=smem, size = 0x4, offset = 0x4, fixed_abs, tag = 'smem constant byte address 0x4 - core index']
  #allocation1 [shape = 'u32[144,128]{1,0:T(1,128)}', space=vmem, size = 0x12000, scoped, tag = 'internal scratch']
  #allocation2 [shape = 'f32[4,512]{1,0:T(4,128)}', space=vmem, size = 0x2000, scoped, tag = 'scratch operand']
  %s0 = inlined_call_operand.vmem [shape: f32[9,256], index: 0, kind: input, shape index: {}]
  %s1 = inlined_call_operand.vmem [shape: f32[2,8,256], index: 1, kind: input, shape index: {}]
  %s2 = inlined_call_operand.vmem [shape: f32[8,8], index: 2, kind: input, shape index: {}]
  %s3 = inlined_call_operand.vmem [shape: f32[1,4,4], index: 3, kind: input, shape index: {}]
  %s4 = inlined_call_operand.vmem [shape: f32[1,9,4,4], index: 4, kind: input, shape index: {}]
  %s5 = inlined_call_operand.vmem [shape: f32[8,8], index: 5, kind: input, shape index: {}]
  %s6 = inlined_call_operand.vmem [shape: f32[32,1], index: 6, kind: input, shape index: {}]
  %s7 = inlined_call_operand.vmem [shape: f32[2,8,256], index: 7, kind: output, shape index: {}]
  %s8 = sld [smem:[#allocation0]]
  $region61: #{c3_forward_pallas.1} parent=0
    _
  %s10 = ssub.s32 1, %s8
  %s11 = scalar_select 0, %s10, %s8
  loop: start=0, step=1, limit=4
  $region2: #{c3_forward_pallas.1} parent=0 // loop_pre_header
    _
  $region3: #{c3_forward_pallas.1} parent=0 // loop_header
    %s13 = sphi 0, %s17
    %p14 = scmp.ge.s32.totalorder %s13, 4
    %s21 = sphi 0, %s21
    %s23 = sphi 0, %s21
    %s24 = sphi 0, %s23
    %s38 = sphi 0, %s24
    %s44 = sphi 0, %s46
    %s47 = sphi 0, %s44
    %s48 = sphi 0, %s47
    %s64 = sphi 0, %s48
    %s68 = sphi 0, %s68
    %s70 = sphi 0, %s68
    %s71 = sphi 0, %s70
    %s85 = sphi 0, %s71
    %s89 = sphi 0, %s89
    %s91 = sphi 0, %s89
    %s92 = sphi 0, %s91
    %s106 = sphi 0, %s92
    %s110 = sphi 0, %s110
    %s112 = sphi 0, %s110
    %s113 = sphi 0, %s112
    %s127 = sphi 0, %s113
    %s131 = sphi 0, %s131
    %s133 = sphi 0, %s131
    %s134 = sphi 0, %s133
    %s148 = sphi 0, %s134
    %s152 = sphi 0, %s152
    %s154 = sphi 0, %s152
    %s155 = sphi 0, %s154
    %s169 = sphi 0, %s155
    %s175 = sphi 0, %s177
    %s178 = sphi 0, %s175
    %s179 = sphi 0, %s178
    %s195 = sphi 0, %s179
  $region4: #{c3_forward_pallas.1} parent=0 // loop_header_branch
    %16 = sbr.rel (%p14) target = $region8
  $region5: #{c3_forward_pallas.1} parent=0 // loop_body
    %s18 = ssub.s32 %s13, 1
    %s19 = ssub.s32 %s13, 2
    %s20 = sadd.s32 %s13, 1
    %s22 = sadd.s32 %s21, 1
    %p25 = scmp.eq.s32.totalorder %s13, 1
    %p26 = scmp.ne.s32.totalorder %s21, %s23
    %p27 = scmp.eq.s32.totalorder %s13, 0
    %p28 = por %p26, %p27
    %p29 = scmp.ne.s32.totalorder %s21, %s23
    %p30 = scmp.eq.s32.totalorder %s18, 1
    %p31 = por %p29, %p30
    %p32 = scmp.ne.s32.totalorder %s23, %s24
    %p33 = scmp.eq.s32.totalorder %s18, 0
    %p34 = por %p32, %p33
    %p35 = scmp.ne.s32.totalorder %s23, %s24
    %p36 = scmp.eq.s32.totalorder %s19, 1
    %p37 = por %p35, %p36
    %p39 = scmp.ne.s32.totalorder %s24, %s38
    %p40 = scmp.eq.s32.totalorder %s19, 0
    %p41 = por %p39, %p40
    %s42 = ssub.s32 %s13, %s20
    %p43 = scmp.eq.s32.totalorder %s42, 0
    %s45 = sadd.s32 %s44, 1
    %s46 = scalar_select %p43, %s44, %s45
    %p49 = pneg %p43
    %p50 = scmp.eq.s32.totalorder %s13, 1
    %p51 = por %p49, %p50
    %p52 = scmp.ne.s32.totalorder %s44, %s47
    %p53 = scmp.eq.s32.totalorder %s13, 0
    %p54 = por %p52, %p53
    %p55 = scmp.ne.s32.totalorder %s44, %s47
    %p56 = scmp.eq.s32.totalorder %s18, 1
    %p57 = por %p55, %p56
    %p58 = scmp.ne.s32.totalorder %s47, %s48
    %p59 = scmp.eq.s32.totalorder %s18, 0
    %p60 = por %p58, %p59
    %p61 = scmp.ne.s32.totalorder %s47, %s48
    %p62 = scmp.eq.s32.totalorder %s19, 1
    %p63 = por %p61, %p62
    %p65 = scmp.ne.s32.totalorder %s48, %s64
    %p66 = scmp.eq.s32.totalorder %s19, 0
    %p67 = por %p65, %p66
    %s69 = sadd.s32 %s68, 1
    %p72 = scmp.eq.s32.totalorder %s13, 1
    %p73 = scmp.ne.s32.totalorder %s68, %s70
    %p74 = scmp.eq.s32.totalorder %s13, 0
    %p75 = por %p73, %p74
    %p76 = scmp.ne.s32.totalorder %s68, %s70
    %p77 = scmp.eq.s32.totalorder %s18, 1
    %p78 = por %p76, %p77
    %p79 = scmp.ne.s32.totalorder %s70, %s71
    %p80 = scmp.eq.s32.totalorder %s18, 0
    %p81 = por %p79, %p80
    %p82 = scmp.ne.s32.totalorder %s70, %s71
    %p83 = scmp.eq.s32.totalorder %s19, 1
    %p84 = por %p82, %p83
    %p86 = scmp.ne.s32.totalorder %s71, %s85
    %p87 = scmp.eq.s32.totalorder %s19, 0
    %p88 = por %p86, %p87
    %s90 = sadd.s32 %s89, 1
    %p93 = scmp.eq.s32.totalorder %s13, 1
    %p94 = scmp.ne.s32.totalorder %s89, %s91
    %p95 = scmp.eq.s32.totalorder %s13, 0
    %p96 = por %p94, %p95
    %p97 = scmp.ne.s32.totalorder %s89, %s91
    %p98 = scmp.eq.s32.totalorder %s18, 1
    %p99 = por %p97, %p98
    %p100 = scmp.ne.s32.totalorder %s91, %s92
    %p101 = scmp.eq.s32.totalorder %s18, 0
    %p102 = por %p100, %p101
    %p103 = scmp.ne.s32.totalorder %s91, %s92
    %p104 = scmp.eq.s32.totalorder %s19, 1
    %p105 = por %p103, %p104
    %p107 = scmp.ne.s32.totalorder %s92, %s106
    %p108 = scmp.eq.s32.totalorder %s19, 0
    %p109 = por %p107, %p108
    %s111 = sadd.s32 %s110, 1
    %p114 = scmp.eq.s32.totalorder %s13, 1
    %p115 = scmp.ne.s32.totalorder %s110, %s112
    %p116 = scmp.eq.s32.totalorder %s13, 0
    %p117 = por %p115, %p116
    %p118 = scmp.ne.s32.totalorder %s110, %s112
    %p119 = scmp.eq.s32.totalorder %s18, 1
    %p120 = por %p118, %p119
    %p121 = scmp.ne.s32.totalorder %s112, %s113
    %p122 = scmp.eq.s32.totalorder %s18, 0
    %p123 = por %p121, %p122
    %p124 = scmp.ne.s32.totalorder %s112, %s113
    %p125 = scmp.eq.s32.totalorder %s19, 1
    %p126 = por %p124, %p125
    %p128 = scmp.ne.s32.totalorder %s113, %s127
    %p129 = scmp.eq.s32.totalorder %s19, 0
    %p130 = por %p128, %p129
    %s132 = sadd.s32 %s131, 1
    %p135 = scmp.eq.s32.totalorder %s13, 1
    %p136 = scmp.ne.s32.totalorder %s131, %s133
    %p137 = scmp.eq.s32.totalorder %s13, 0
    %p138 = por %p136, %p137
    %p139 = scmp.ne.s32.totalorder %s131, %s133
    %p140 = scmp.eq.s32.totalorder %s18, 1
    %p141 = por %p139, %p140
    %p142 = scmp.ne.s32.totalorder %s133, %s134
    %p143 = scmp.eq.s32.totalorder %s18, 0
    %p144 = por %p142, %p143
    %p145 = scmp.ne.s32.totalorder %s133, %s134
    %p146 = scmp.eq.s32.totalorder %s19, 1
    %p147 = por %p145, %p146
    %p149 = scmp.ne.s32.totalorder %s134, %s148
    %p150 = scmp.eq.s32.totalorder %s19, 0
    %p151 = por %p149, %p150
    %s153 = sadd.s32 %s152, 1
    %p156 = scmp.eq.s32.totalorder %s13, 1
    %p157 = scmp.ne.s32.totalorder %s152, %s154
    %p158 = scmp.eq.s32.totalorder %s13, 0
    %p159 = por %p157, %p158
    %p160 = scmp.ne.s32.totalorder %s152, %s154
    %p161 = scmp.eq.s32.totalorder %s18, 1
    %p162 = por %p160, %p161
    %p163 = scmp.ne.s32.totalorder %s154, %s155
    %p164 = scmp.eq.s32.totalorder %s18, 0
    %p165 = por %p163, %p164
    %p166 = scmp.ne.s32.totalorder %s154, %s155
    %p167 = scmp.eq.s32.totalorder %s19, 1
    %p168 = por %p166, %p167
    %p170 = scmp.ne.s32.totalorder %s155, %s169
    %p171 = scmp.eq.s32.totalorder %s19, 0
    %p172 = por %p170, %p171
    %s173 = ssub.s32 %s13, %s20
    %p174 = scmp.eq.s32.totalorder %s173, 0
    %s176 = sadd.s32 %s175, 1
    %s177 = scalar_select %p174, %s175, %s176
    %p180 = pneg %p174
    %p181 = scmp.eq.s32.totalorder %s13, 1
    %p182 = por %p180, %p181
    %p183 = scmp.ne.s32.totalorder %s175, %s178
    %p184 = scmp.eq.s32.totalorder %s13, 0
    %p185 = por %p183, %p184
    %p186 = scmp.ne.s32.totalorder %s175, %s178
    %p187 = scmp.eq.s32.totalorder %s18, 1
    %p188 = por %p186, %p187
    %p189 = scmp.ne.s32.totalorder %s178, %s179
    %p190 = scmp.eq.s32.totalorder %s18, 0
    %p191 = por %p189, %p190
    %p192 = scmp.ne.s32.totalorder %s178, %s179
    %p193 = scmp.eq.s32.totalorder %s19, 1
    %p194 = por %p192, %p193
    %p196 = scmp.ne.s32.totalorder %s179, %s195
    %p197 = scmp.eq.s32.totalorder %s19, 0
    %p198 = por %p196, %p197
    %p199 = scmp.le.s32.totalorder 1, %s13
    %p200 = scmp.lt.s32.totalorder %s13, 3
    %p201 = pnand %p199, %p200
    %p202 = pneg %p201
    // Predicated region
    $region9: #{c3_forward_pallas.1} parent=5 // pred_check
      _
    $region10: #{c3_forward_pallas.1} parent=5 // pred_check_branch
      %204 = sbr.rel (%p201) target = $region12
    $region11: #{c3_forward_pallas.1} parent=5 // pred_region
      %s205 = ssub.s32 %s13, 1
      // Predicated region
      $region13: #{c3_forward_pallas.1} parent=11 // pred_check
        %p206 = pneg %p34
      $region14: #{c3_forward_pallas.1} parent=11 // pred_check_branch
        %208 = sbr.rel (%p206) target = $region16
      $region15: #{c3_forward_pallas.1} parent=11 // pred_region
        _
      $region16: #{c3_forward_pallas.1} parent=11 // pred_fallthru
        _
      // Predicated region
      $region17: #{c3_forward_pallas.1} parent=11 // pred_check
        %p209 = pneg %p81
      $region18: #{c3_forward_pallas.1} parent=11 // pred_check_branch
        %211 = sbr.rel (%p209) target = $region20
      $region19: #{c3_forward_pallas.1} parent=11 // pred_region
        _
      $region20: #{c3_forward_pallas.1} parent=11 // pred_fallthru
        _
      // Predicated region
      $region21: #{c3_forward_pallas.1} parent=11 // pred_check
        %p212 = pneg %p102
      $region22: #{c3_forward_pallas.1} parent=11 // pred_check_branch
        %214 = sbr.rel (%p212) target = $region24
      $region23: #{c3_forward_pallas.1} parent=11 // pred_region
        _
      $region24: #{c3_forward_pallas.1} parent=11 // pred_fallthru
        _
      // Predicated region
      $region25: #{c3_forward_pallas.1} parent=11 // pred_check
        %p215 = pneg %p123
      $region26: #{c3_forward_pallas.1} parent=11 // pred_check_branch
        %217 = sbr.rel (%p215) target = $region28
      $region27: #{c3_forward_pallas.1} parent=11 // pred_region
        _
      $region28: #{c3_forward_pallas.1} parent=11 // pred_fallthru
        _
      // Predicated region
      $region29: #{c3_forward_pallas.1} parent=11 // pred_check
        %p218 = pneg %p144
      $region30: #{c3_forward_pallas.1} parent=11 // pred_check_branch
        %220 = sbr.rel (%p218) target = $region32
      $region31: #{c3_forward_pallas.1} parent=11 // pred_region
        _
      $region32: #{c3_forward_pallas.1} parent=11 // pred_fallthru
        _
      // Predicated region
      $region33: #{c3_forward_pallas.1} parent=11 // pred_check
        %p221 = pneg %p165
      $region34: #{c3_forward_pallas.1} parent=11 // pred_check_branch
        %223 = sbr.rel (%p221) target = $region36
      $region35: #{c3_forward_pallas.1} parent=11 // pred_region
        _
      $region36: #{c3_forward_pallas.1} parent=11 // pred_fallthru
        _
    $region12: #{c3_forward_pallas.1} parent=5 // pred_fallthru
      _
    %p224 = scmp.lt.s32.totalorder %s13, 2
    // Predicated region
    $region37: #{c3_forward_pallas.1} parent=5 // pred_check
      %p225 = pneg %p224
    $region38: #{c3_forward_pallas.1} parent=5 // pred_check_branch
      %227 = sbr.rel (%p225) target = $region40
    $region39: #{c3_forward_pallas.1} parent=5 // pred_region
      // Predicated region
      $region41: #{c3_forward_pallas.1} parent=39 // pred_check
        %p228 = pneg %p54
      $region42: #{c3_forward_pallas.1} parent=39 // pred_check_branch
        %230 = sbr.rel (%p228) target = $region44
      $region43: #{c3_forward_pallas.1} parent=39 // pred_region
        %p231 = scmp.lt.s32.totalorder %s13, 1
        %s232 = scalar_select %p231, %s13, 1
        %s233 = smul.addr %s232, 2
        %s234 = smul.addr %s233, 8
        %s235 = scalar_lea.vmem %s1, %s234
      $region44: #{c3_forward_pallas.1} parent=39 // pred_fallthru
        _
    $region40: #{c3_forward_pallas.1} parent=5 // pred_fallthru
      _
    %p236 = scmp.le.s32.totalorder 1, %s13
    %p237 = scmp.lt.s32.totalorder %s13, 3
    %p238 = pnand %p236, %p237
    %p239 = pneg %p238
    // Predicated region
    $region45: #{c3_forward_pallas.1} parent=5 // pred_check
      _
    $region46: #{c3_forward_pallas.1} parent=5 // pred_check_branch
      %241 = sbr.rel (%p238) target = $region48
    $region47: #{c3_forward_pallas.1} parent=5 // pred_region
      %s242 = ssub.s32 %s13, 1
      %p243 = pneg %p34
      %p244 = pneg %p31
      %p245 = scmp.lt.s32.totalorder %s18, 1
      %s246 = scalar_select %p245, %s18, 1
      %s247 = smul.addr %s246, 2
      %s248 = smul.addr %s247, 8
      %s249 = scalar_lea.vmem %s1, %s248
      %p250 = pneg %p60
      %p251 = pneg %p57
      %p252 = pneg %p81
      %p253 = pneg %p78
      %p254 = pneg %p102
      %p255 = pneg %p99
      %p256 = pneg %p123
      %p257 = pneg %p120
      %p258 = pneg %p144
      %p259 = pneg %p141
      %p260 = pneg %p165
      %p261 = pneg %p162
      %p262 = pneg %p191
      %p263 = pneg %p188
      %p264 = scmp.lt.s32.totalorder %s18, 1
      %s265 = scalar_select %p264, %s18, 1
      %s266 = smul.addr %s265, 2
      %s267 = smul.addr %s266, 8
      %s268 = scalar_lea.vmem %s7, %s267
      %p269 = scmp.lt.s32.totalorder %s18, 1
      %s270 = scalar_select %p269, %s18, 1
      %s271 = smul.addr %s270, 2
      %s272 = smul.addr %s271, 8
      %s273 = scalar_lea.vmem %s1, %s272
      %p274 = scmp.lt.s32.totalorder %s18, 1
      %s275 = scalar_select %p274, %s18, 1
      %s276 = smul.addr %s275, 2
      %s277 = smul.addr %s276, 8
      %s278 = scalar_lea.vmem %s7, %s277
      %v279 = vld [vmem:[%s273] sm:$0xff]
      %v280 = vld [vmem:[%s273 + $0x8] sm:$0xff]
      %v281 = vld [vmem:[%s2] sm:$0xff]
      %v282 = vld [vmem:[%s6] sm:$0xff]
      %284 = vset.pattern.permute.xlu0 0
      %285 = vperm.xlu0 %284, %v282
      %v286 = vpop.permute.xlu0 %285
      %vm288 = vcmask 64512
      %v290 = vsel %vm288, %v281, 0
      %292 = vmatprep.subr.mxu0 0.0
      %293 = vmatpush1.msra.mxu0 0.0
      %294 = vmatprep.subr.mxu0 0.0
      %295 = vmatpush1.msra.mxu0 0.0
      %296 = vmatprep.subr.mxu0 0.0
      %297 = vmatpush1.msra.mxu0 0.0
      %298 = vmatprep.subr.mxu0 0.0
      %299 = vmatpush1.msra.mxu0 0.0
      %300 = vmatprep.subr.mxu0 0.0
      %301 = vmatpush1.msra.mxu0 0.0
      %302 = vmatprep.subr.mxu0 0.0
      %303 = vmatpush1.msra.mxu0 0.0
      %304 = vmatprep.subr.mxu0 0.0
      %305 = vmatpush1.msra.mxu0 0.0
      %306 = vmatprep.subr.mxu0 0.0
      %307 = vmatpush1.msra.mxu0 0.0
      %308 = vmatprep.subr.mxu0 0.0
      %309 = vmatpush1.msra.mxu0 0.0
      %310 = vmatprep.subr.mxu0 0.0
      %311 = vmatpush1.msra.mxu0 0.0
      %312 = vmatprep.subr.mxu0 0.0
      %313 = vmatpush1.msra.mxu0 0.0
      %314 = vmatprep.subr.mxu0 0.0
      %315 = vmatpush1.msra.mxu0 0.0
      %316 = vmatprep.subr.mxu0 0.0
      %317 = vmatpush1.msra.mxu0 0.0
      %318 = vmatprep.subr.mxu0 0.0
      %319 = vmatpush1.msra.mxu0 0.0
      %320 = vmatprep.subr.mxu0 0.0
      %321 = vmatpush1.msra.mxu0 0.0
      %322 = vmatprep.subr.mxu0 %v280
      %323 = vmatpush1.msra.mxu0 %v279
      %324 = vmatprep.subr.mxu0 0.0
      %325 = vmatpush2.msra.mxu0 0.0
      %326 = vmatprep.subr.mxu0 0.0
      %327 = vmatpush2.msra.mxu0 0.0
      %328 = vmatprep.subr.mxu0 0.0
      %329 = vmatpush2.msra.mxu0 0.0
      %330 = vmatprep.subr.mxu0 0.0
      %331 = vmatpush2.msra.mxu0 0.0
      %332 = vmatprep.subr.mxu0 0.0
      %333 = vmatpush2.msra.mxu0 0.0
      %334 = vmatprep.subr.mxu0 0.0
      %335 = vmatpush2.msra.mxu0 0.0
      %336 = vmatprep.subr.mxu0 0.0
      %337 = vmatpush2.msra.mxu0 0.0
      %338 = vmatprep.subr.mxu0 0.0
      %339 = vmatpush2.msra.mxu0 0.0
      %340 = vmatprep.subr.mxu0 0.0
      %341 = vmatpush2.msra.mxu0 0.0
      %342 = vmatprep.subr.mxu0 0.0
      %343 = vmatpush2.msra.mxu0 0.0
      %344 = vmatprep.subr.mxu0 0.0
      %345 = vmatpush2.msra.mxu0 0.0
      %346 = vmatprep.subr.mxu0 0.0
      %347 = vmatpush2.msra.mxu0 0.0
      %348 = vmatprep.subr.mxu0 0.0
      %349 = vmatpush2.msra.mxu0 0.0
      %350 = vmatprep.subr.mxu0 0.0
      %351 = vmatpush2.msra.mxu0 0.0
      %352 = vmatprep.subr.mxu0 0.0
      %353 = vmatpush2.msra.mxu0 0.0
      %354 = vmatprep.subr.mxu0 0.0
      %355 = vmatpush2.msra.mxu0 0.0
      %356 = vmatprep.mubr.f32.mxu0 0.0
      %357 = vmatmul.mubr.f32.gmra.mxu0 %v290
      %v358 = vpop.f32.mrf.mxu0
      %v359 = vadd.f32 %v286, %v358
      %v360 = vpop.f32.mrf.mxu0
      %v361 = vadd.f32 %v286, %v360
      %362 = vdwg.mxu0
      %v363 = vxor.u32 %v359, 2147483648
      %v364 = vxor.u32 %v361, 2147483648
      %v365 = vmul.f32 %v363, 1.442695
      %v366 = vpow.pop %v365
      %v367 = vmul.f32 %v364, 1.442695
      %v368 = vpow.pop %v367
      %v369 = vadd.f32 %v366, 1.0
      %v370 = vadd.f32 %v368, 1.0
      %v371 = vrcp.pop %v369
      %v372 = vmul.f32 1.0, %v371
      %v373 = vrcp.pop %v370
      %v374 = vmul.f32 1.0, %v373
      %v375 = vmul.f32 %v359, %v372
      %v376 = vmul.f32 %v361, %v374
      %377 = vst [vmem:[#allocation2] sm:$0xf] 0.0
      %378 = vst [vmem:[#allocation2 + $0xc] sm:$0xf] 0.0
      %v379 = vld [vmem:[%s0] sm:$0xff]
      %v380 = vld [vmem:[%s0 + $0x8] sm:$0xff]
      %v381 = vld [vmem:[%s0 + $0x10] sm:$0x1]
      %v382 = vld [vmem:[%s0 + $0x18] sm:$0x1]
      %v383 = vld [vmem:[%s6 + $0x8] sm:$0xf]
      %v384 = vld [vmem:[%s6 + $0x10] sm:$0xf]
      %v385 = vld [vmem:[%s3] sm:$0xf]
      %387 = vset.pattern.permute.xlu0 0
      %388 = vperm.xlu0 %387, %v383
      %v389 = vpop.permute.xlu0 %388
      %vm391 = vcmask 31744
      %v393 = vsel %vm391, %v385, 0
      %vm395 = vcmask 1043456
      %v397 = vsel %vm395, %v375, 0
      %v400 = vsel %vm395, %v376, 0
      %402 = vmatprep.subr.mxu0 0.0
      %403 = vmatpush1.msra.mxu0 0.0
      %404 = vmatprep.subr.mxu0 0.0
      %405 = vmatpush1.msra.mxu0 0.0
      %406 = vmatprep.subr.mxu0 0.0
      %407 = vmatpush1.msra.mxu0 0.0
      %408 = vmatprep.subr.mxu0 0.0
      %409 = vmatpush1.msra.mxu0 0.0
      %410 = vmatprep.subr.mxu0 0.0
      %411 = vmatpush1.msra.mxu0 0.0
      %412 = vmatprep.subr.mxu0 0.0
      %413 = vmatpush1.msra.mxu0 0.0
      %414 = vmatprep.subr.mxu0 0.0
      %415 = vmatpush1.msra.mxu0 0.0
      %416 = vmatprep.subr.mxu0 0.0
      %417 = vmatpush1.msra.mxu0 0.0
      %418 = vmatprep.subr.mxu0 0.0
      %419 = vmatpush1.msra.mxu0 0.0
      %420 = vmatprep.subr.mxu0 0.0
      %421 = vmatpush1.msra.mxu0 0.0
      %422 = vmatprep.subr.mxu0 0.0
      %423 = vmatpush1.msra.mxu0 0.0
      %424 = vmatprep.subr.mxu0 0.0
      %425 = vmatpush1.msra.mxu0 0.0
      %426 = vmatprep.subr.mxu0 0.0
      %427 = vmatpush1.msra.mxu0 0.0
      %428 = vmatprep.subr.mxu0 0.0
      %429 = vmatpush1.msra.mxu0 0.0
      %430 = vmatprep.subr.mxu0 0.0
      %431 = vmatpush1.msra.mxu0 0.0
      %432 = vmatprep.subr.mxu0 %v400
      %433 = vmatpush1.msra.mxu0 %v397
      %434 = vmatprep.subr.mxu0 0.0
      %435 = vmatpush2.msra.mxu0 0.0
      %436 = vmatprep.subr.mxu0 0.0
      %437 = vmatpush2.msra.mxu0 0.0
      %438 = vmatprep.subr.mxu0 0.0
      %439 = vmatpush2.msra.mxu0 0.0
      %440 = vmatprep.subr.mxu0 0.0
      %441 = vmatpush2.msra.mxu0 0.0
      %442 = vmatprep.subr.mxu0 0.0
      %443 = vmatpush2.msra.mxu0 0.0
      %444 = vmatprep.subr.mxu0 0.0
      %445 = vmatpush2.msra.mxu0 0.0
      %446 = vmatprep.subr.mxu0 0.0
      %447 = vmatpush2.msra.mxu0 0.0
      %448 = vmatprep.subr.mxu0 0.0
      %449 = vmatpush2.msra.mxu0 0.0
      %450 = vmatprep.subr.mxu0 0.0
      %451 = vmatpush2.msra.mxu0 0.0
      %452 = vmatprep.subr.mxu0 0.0
      %453 = vmatpush2.msra.mxu0 0.0
      %454 = vmatprep.subr.mxu0 0.0
      %455 = vmatpush2.msra.mxu0 0.0
      %456 = vmatprep.subr.mxu0 0.0
      %457 = vmatpush2.msra.mxu0 0.0
      %458 = vmatprep.subr.mxu0 0.0
      %459 = vmatpush2.msra.mxu0 0.0
      %460 = vmatprep.subr.mxu0 0.0
      %461 = vmatpush2.msra.mxu0 0.0
      %462 = vmatprep.subr.mxu0 0.0
      %463 = vmatpush2.msra.mxu0 0.0
      %464 = vmatprep.subr.mxu0 0.0
      %465 = vmatpush2.msra.mxu0 0.0
      %466 = vmatprep.mubr.f32.mxu0 0.0
      %467 = vmatmul.mubr.f32.gmra.mxu0 %v393
      %v468 = vpop.f32.mrf.mxu0
      %v469 = vadd.f32 %v389, %v468
      %v470 = vpop.f32.mrf.mxu0
      %v471 = vadd.f32 %v389, %v470
      %472 = vdwg.mxu0
      %v473 = vxor.u32 %v469, 2147483648
      %v474 = vxor.u32 %v471, 2147483648
      %v475 = vmul.f32 %v473, 1.442695
      %v476 = vpow.pop %v475
      %v477 = vmul.f32 %v474, 1.442695
      %v478 = vpow.pop %v477
      %v479 = vadd.f32 %v476, 1.0
      %v480 = vadd.f32 %v478, 1.0
      %v481 = vrcp.pop %v479
      %v482 = vmul.f32 1.0, %v481
      %v483 = vrcp.pop %v480
      %v484 = vmul.f32 1.0, %v483
      %v485 = vmul.f32 %v469, %v482
      %v486 = vmul.f32 %v471, %v484
      %v489 = vcombine.low %v485, %v486
      %491 = vst [vmem:[#allocation2 + $0x4] sm:$0xff] %v489
      %v492 = vld [vmem:[#allocation2] sm:$0xff]
      %v493 = vld [vmem:[#allocation2 + $0x8] sm:$0xf]
      %v494 = vlaneseq
      %v495 = vshrl.u32 %v494, 7
      %v496 = vsub.s32 0, %v495
      %v497 = vrot.slane %v379, %v496
      %v498 = vlaneseq
      %v499 = vshrl.u32 %v498, 7
      %v500 = vsub.s32 0, %v499
      %v501 = vrot.slane %v380, %v500
      %v504 = vcombine.low %v497, %v501
      %505 = vrot.lane.b32.xlu0 %v504, 111
      %v506 = vpop.permute.xlu0 %505
      %v507 = vrot.slane %v506, 4
      %vm508 = vcmask 908288
      %v509 = vsel %vm508, %v507, %v506
      %v512 = vmul.f32 %v492, %v509
      %v513 = vmul.f32 %v493, %v507
      %v514 = vld [vmem:[%s4] sm:$0xf]
      %v515 = vlaneseq
      %v516 = vshrl.u32 %v515, 7
      %v517 = vsub.s32 1, %v516
      %v518 = vrot.slane %v379, %v517
      %v519 = vlaneseq
      %v520 = vshrl.u32 %v519, 7
      %v521 = vsub.s32 1, %v520
      %v522 = vrot.slane %v380, %v521
      %v525 = vcombine.low %v518, %v522
      %526 = vrot.lane.b32.xlu0 %v525, 112
      %v527 = vpop.permute.xlu0 %526
      %v528 = vrot.slane %v527, 4
      %vm529 = vcmask 916480
      %v530 = vsel %vm529, %v528, %v527
      %v533 = vmul.f32 %v492, %v530
      %v534 = vmul.f32 %v493, %v528
      %s535 = scalar_lea.vmem %s4, 4
      %v536 = vld [vmem:[%s535] sm:$0xf]
      %v539 = vcombine.high %v533, %v533
      %540 = vrot.lane.b32.xlu0 %v533, 16
      %v541 = vpop.permute.xlu0 %540
      %542 = vrot.lane.b32.xlu0 %v539, 16
      %v543 = vpop.permute.xlu0 %542
      %544 = vrot.lane.b32.xlu0 %v534, 16
      %v545 = vpop.permute.xlu0 %544
      %vm546 = vcmask 130048
      %v547 = vsel %vm546, %v541, %v543
      %v548 = vsel %vm546, %v543, %v545
      %v550 = vsel %vm391, %v536, 0
      %v552 = vsel %vm395, %v547, 0
      %v554 = vsel %vm395, %v548, 0
      %556 = vmatprep.subr.mxu0 0.0
      %557 = vmatpush1.msra.mxu0 0.0
      %558 = vmatprep.subr.mxu0 0.0
      %559 = vmatpush1.msra.mxu0 0.0
      %560 = vmatprep.subr.mxu0 0.0
      %561 = vmatpush1.msra.mxu0 0.0
      %562 = vmatprep.subr.mxu0 0.0
      %563 = vmatpush1.msra.mxu0 0.0
      %564 = vmatprep.subr.mxu0 0.0
      %565 = vmatpush1.msra.mxu0 0.0
      %566 = vmatprep.subr.mxu0 0.0
      %567 = vmatpush1.msra.mxu0 0.0
      %568 = vmatprep.subr.mxu0 0.0
      %569 = vmatpush1.msra.mxu0 0.0
      %570 = vmatprep.subr.mxu0 0.0
      %571 = vmatpush1.msra.mxu0 0.0
      %572 = vmatprep.subr.mxu0 0.0
      %573 = vmatpush1.msra.mxu0 0.0
      %574 = vmatprep.subr.mxu0 0.0
      %575 = vmatpush1.msra.mxu0 0.0
      %576 = vmatprep.subr.mxu0 0.0
      %577 = vmatpush1.msra.mxu0 0.0
      %578 = vmatprep.subr.mxu0 0.0
      %579 = vmatpush1.msra.mxu0 0.0
      %580 = vmatprep.subr.mxu0 0.0
      %581 = vmatpush1.msra.mxu0 0.0
      %582 = vmatprep.subr.mxu0 0.0
      %583 = vmatpush1.msra.mxu0 0.0
      %584 = vmatprep.subr.mxu0 0.0
      %585 = vmatpush1.msra.mxu0 0.0
      %586 = vmatprep.subr.mxu0 %v554
      %587 = vmatpush1.msra.mxu0 %v552
      %588 = vmatprep.subr.mxu0 0.0
      %589 = vmatpush2.msra.mxu0 0.0
      %590 = vmatprep.subr.mxu0 0.0
      %591 = vmatpush2.msra.mxu0 0.0
      %592 = vmatprep.subr.mxu0 0.0
      %593 = vmatpush2.msra.mxu0 0.0
      %594 = vmatprep.subr.mxu0 0.0
      %595 = vmatpush2.msra.mxu0 0.0
      %596 = vmatprep.subr.mxu0 0.0
      %597 = vmatpush2.msra.mxu0 0.0
      %598 = vmatprep.subr.mxu0 0.0
      %599 = vmatpush2.msra.mxu0 0.0
      %600 = vmatprep.subr.mxu0 0.0
      %601 = vmatpush2.msra.mxu0 0.0
      %602 = vmatprep.subr.mxu0 0.0
      %603 = vmatpush2.msra.mxu0 0.0
      %604 = vmatprep.subr.mxu0 0.0
      %605 = vmatpush2.msra.mxu0 0.0
      %606 = vmatprep.subr.mxu0 0.0
      %607 = vmatpush2.msra.mxu0 0.0
      %608 = vmatprep.subr.mxu0 0.0
      %609 = vmatpush2.msra.mxu0 0.0
      %610 = vmatprep.subr.mxu0 0.0
      %611 = vmatpush2.msra.mxu0 0.0
      %612 = vmatprep.subr.mxu0 0.0
      %613 = vmatpush2.msra.mxu0 0.0
      %614 = vmatprep.subr.mxu0 0.0
      %615 = vmatpush2.msra.mxu0 0.0
      %616 = vmatprep.subr.mxu0 0.0
      %617 = vmatpush2.msra.mxu0 0.0
      %618 = vmatprep.subr.mxu0 0.0
      %619 = vmatpush2.msra.mxu0 0.0
      %620 = vmatprep.mubr.f32.mxu0 0.0
      %621 = vmatmul.mubr.f32.gmra.mxu0 %v550
      %v622 = vpop.f32.mrf.mxu0
      %v623 = vadd.f32 0.0, %v622
      %v624 = vpop.f32.mrf.mxu0
      %v625 = vadd.f32 0.0, %v624
      %626 = vdwg.mxu0
      %v629 = vcombine.high %v512, %v512
      %630 = vrot.lane.b32.xlu0 %v512, 17
      %v631 = vpop.permute.xlu0 %630
      %632 = vrot.lane.b32.xlu0 %v629, 17
      %v633 = vpop.permute.xlu0 %632
      %634 = vrot.lane.b32.xlu0 %v513, 17
      %v635 = vpop.permute.xlu0 %634
      %vm636 = vcmask 138240
      %v637 = vsel %vm636, %v631, %v633
      %v638 = vsel %vm636, %v633, %v635
      %v640 = vsel %vm391, %v514, 0
      %v642 = vsel %vm395, %v637, 0
      %v644 = vsel %vm395, %v638, 0
      %646 = vmatprep.subr.mxu0 0.0
      %647 = vmatpush1.msra.mxu0 0.0
      %648 = vmatprep.subr.mxu0 0.0
      %649 = vmatpush1.msra.mxu0 0.0
      %650 = vmatprep.subr.mxu0 0.0
      %651 = vmatpush1.msra.mxu0 0.0
      %652 = vmatprep.subr.mxu0 0.0
      %653 = vmatpush1.msra.mxu0 0.0
      %654 = vmatprep.subr.mxu0 0.0
      %655 = vmatpush1.msra.mxu0 0.0
      %656 = vmatprep.subr.mxu0 0.0
      %657 = vmatpush1.msra.mxu0 0.0
      %658 = vmatprep.subr.mxu0 0.0
      %659 = vmatpush1.msra.mxu0 0.0
      %660 = vmatprep.subr.mxu0 0.0
      %661 = vmatpush1.msra.mxu0 0.0
      %662 = vmatprep.subr.mxu0 0.0
      %663 = vmatpush1.msra.mxu0 0.0
      %664 = vmatprep.subr.mxu0 0.0
      %665 = vmatpush1.msra.mxu0 0.0
      %666 = vmatprep.subr.mxu0 0.0
      %667 = vmatpush1.msra.mxu0 0.0
      %668 = vmatprep.subr.mxu0 0.0
      %669 = vmatpush1.msra.mxu0 0.0
      %670 = vmatprep.subr.mxu0 0.0
      %671 = vmatpush1.msra.mxu0 0.0
      %672 = vmatprep.subr.mxu0 0.0
      %673 = vmatpush1.msra.mxu0 0.0
      %674 = vmatprep.subr.mxu0 0.0
      %675 = vmatpush1.msra.mxu0 0.0
      %676 = vmatprep.subr.mxu0 %v644
      %677 = vmatpush1.msra.mxu0 %v642
      %678 = vmatprep.subr.mxu0 0.0
      %679 = vmatpush2.msra.mxu0 0.0
      %680 = vmatprep.subr.mxu0 0.0
      %681 = vmatpush2.msra.mxu0 0.0
      %682 = vmatprep.subr.mxu0 0.0
      %683 = vmatpush2.msra.mxu0 0.0
      %684 = vmatprep.subr.mxu0 0.0
      %685 = vmatpush2.msra.mxu0 0.0
      %686 = vmatprep.subr.mxu0 0.0
      %687 = vmatpush2.msra.mxu0 0.0
      %688 = vmatprep.subr.mxu0 0.0
      %689 = vmatpush2.msra.mxu0 0.0
      %690 = vmatprep.subr.mxu0 0.0
      %691 = vmatpush2.msra.mxu0 0.0
      %692 = vmatprep.subr.mxu0 0.0
      %693 = vmatpush2.msra.mxu0 0.0
      %694 = vmatprep.subr.mxu0 0.0
      %695 = vmatpush2.msra.mxu0 0.0
      %696 = vmatprep.subr.mxu0 0.0
      %697 = vmatpush2.msra.mxu0 0.0
      %698 = vmatprep.subr.mxu0 0.0
      %699 = vmatpush2.msra.mxu0 0.0
      %700 = vmatprep.subr.mxu0 0.0
      %701 = vmatpush2.msra.mxu0 0.0
      %702 = vmatprep.subr.mxu0 0.0
      %703 = vmatpush2.msra.mxu0 0.0
      %704 = vmatprep.subr.mxu0 0.0
      %705 = vmatpush2.msra.mxu0 0.0
      %706 = vmatprep.subr.mxu0 0.0
      %707 = vmatpush2.msra.mxu0 0.0
      %708 = vmatprep.subr.mxu0 0.0
      %709 = vmatpush2.msra.mxu0 0.0
      %710 = vmatprep.mubr.f32.mxu0 0.0
      %711 = vmatmul.mubr.f32.gmra.mxu0 %v640
      %v712 = vpop.f32.mrf.mxu0
      %v713 = vadd.f32 %v623, %v712
      %v714 = vpop.f32.mrf.mxu0
      %v715 = vadd.f32 %v625, %v714
      %716 = vdwg.mxu0
      %v717 = vld [vmem:[#allocation2] sm:$0xff]
      %v718 = vld [vmem:[#allocation2 + $0x8] sm:$0xf]
      %v719 = vlaneseq
      %v720 = vshrl.u32 %v719, 7
      %v721 = vsub.s32 2, %v720
      %v722 = vrot.slane %v379, %v721
      %v723 = vlaneseq
      %v724 = vshrl.u32 %v723, 7
      %v725 = vsub.s32 2, %v724
      %v726 = vrot.slane %v380, %v725
      %v729 = vcombine.low %v722, %v726
      %730 = vrot.lane.b32.xlu0 %v729, 113
      %v731 = vpop.permute.xlu0 %730
      %v732 = vrot.slane %v731, 4
      %vm733 = vcmask 924672
      %v734 = vsel %vm733, %v732, %v731
      %v737 = vmul.f32 %v717, %v734
      %v738 = vmul.f32 %v718, %v732
      %s739 = scalar_lea.vmem %s4, 8
      %v740 = vld [vmem:[%s739] sm:$0xf]
      %v743 = vcombine.high %v737, %v737
      %744 = vrot.lane.b32.xlu0 %v737, 15
      %v745 = vpop.permute.xlu0 %744
      %746 = vrot.lane.b32.xlu0 %v743, 15
      %v747 = vpop.permute.xlu0 %746
      %748 = vrot.lane.b32.xlu0 %v738, 15
      %v749 = vpop.permute.xlu0 %748
      %vm750 = vcmask 121856
      %v751 = vsel %vm750, %v745, %v747
      %v752 = vsel %vm750, %v747, %v749
      %v754 = vsel %vm391, %v740, 0
      %v756 = vsel %vm395, %v751, 0
      %v758 = vsel %vm395, %v752, 0
      %760 = vmatprep.subr.mxu0 0.0
      %761 = vmatpush1.msra.mxu0 0.0
      %762 = vmatprep.subr.mxu0 0.0
      %763 = vmatpush1.msra.mxu0 0.0
      %764 = vmatprep.subr.mxu0 0.0
      %765 = vmatpush1.msra.mxu0 0.0
      %766 = vmatprep.subr.mxu0 0.0
      %767 = vmatpush1.msra.mxu0 0.0
      %768 = vmatprep.subr.mxu0 0.0
      %769 = vmatpush1.msra.mxu0 0.0
      %770 = vmatprep.subr.mxu0 0.0
      %771 = vmatpush1.msra.mxu0 0.0
      %772 = vmatprep.subr.mxu0 0.0
      %773 = vmatpush1.msra.mxu0 0.0
      %774 = vmatprep.subr.mxu0 0.0
      %775 = vmatpush1.msra.mxu0 0.0
      %776 = vmatprep.subr.mxu0 0.0
      %777 = vmatpush1.msra.mxu0 0.0
      %778 = vmatprep.subr.mxu0 0.0
      %779 = vmatpush1.msra.mxu0 0.0
      %780 = vmatprep.subr.mxu0 0.0
      %781 = vmatpush1.msra.mxu0 0.0
      %782 = vmatprep.subr.mxu0 0.0
      %783 = vmatpush1.msra.mxu0 0.0
      %784 = vmatprep.subr.mxu0 0.0
      %785 = vmatpush1.msra.mxu0 0.0
      %786 = vmatprep.subr.mxu0 0.0
      %787 = vmatpush1.msra.mxu0 0.0
      %788 = vmatprep.subr.mxu0 0.0
      %789 = vmatpush1.msra.mxu0 0.0
      %790 = vmatprep.subr.mxu0 %v758
      %791 = vmatpush1.msra.mxu0 %v756
      %792 = vmatprep.subr.mxu0 0.0
      %793 = vmatpush2.msra.mxu0 0.0
      %794 = vmatprep.subr.mxu0 0.0
      %795 = vmatpush2.msra.mxu0 0.0
      %796 = vmatprep.subr.mxu0 0.0
      %797 = vmatpush2.msra.mxu0 0.0
      %798 = vmatprep.subr.mxu0 0.0
      %799 = vmatpush2.msra.mxu0 0.0
      %800 = vmatprep.subr.mxu0 0.0
      %801 = vmatpush2.msra.mxu0 0.0
      %802 = vmatprep.subr.mxu0 0.0
      %803 = vmatpush2.msra.mxu0 0.0
      %804 = vmatprep.subr.mxu0 0.0
      %805 = vmatpush2.msra.mxu0 0.0
      %806 = vmatprep.subr.mxu0 0.0
      %807 = vmatpush2.msra.mxu0 0.0
      %808 = vmatprep.subr.mxu0 0.0
      %809 = vmatpush2.msra.mxu0 0.0
      %810 = vmatprep.subr.mxu0 0.0
      %811 = vmatpush2.msra.mxu0 0.0
      %812 = vmatprep.subr.mxu0 0.0
      %813 = vmatpush2.msra.mxu0 0.0
      %814 = vmatprep.subr.mxu0 0.0
      %815 = vmatpush2.msra.mxu0 0.0
      %816 = vmatprep.subr.mxu0 0.0
      %817 = vmatpush2.msra.mxu0 0.0
      %818 = vmatprep.subr.mxu0 0.0
      %819 = vmatpush2.msra.mxu0 0.0
      %820 = vmatprep.subr.mxu0 0.0
      %821 = vmatpush2.msra.mxu0 0.0
      %822 = vmatprep.subr.mxu0 0.0
      %823 = vmatpush2.msra.mxu0 0.0
      %824 = vmatprep.mubr.f32.mxu0 0.0
      %825 = vmatmul.mubr.f32.gmra.mxu0 %v754
      %v826 = vpop.f32.mrf.mxu0
      %v827 = vadd.f32 0.0, %v826
      %v828 = vpop.f32.mrf.mxu0
      %v829 = vadd.f32 0.0, %v828
      %830 = vdwg.mxu0
      %v831 = vadd.f32 %v713, %v827
      %v832 = vadd.f32 %v715, %v829
      %v833 = vld [vmem:[#allocation2] sm:$0xff]
      %v834 = vld [vmem:[#allocation2 + $0x8] sm:$0xf]
      %v835 = vlaneseq
      %v836 = vshrl.u32 %v835, 7
      %v837 = vsub.s32 3, %v836
      %v838 = vrot.slane %v379, %v837
      %v839 = vlaneseq
      %v840 = vshrl.u32 %v839, 7
      %v841 = vsub.s32 3, %v840
      %v842 = vrot.slane %v380, %v841
      %v845 = vcombine.low %v838, %v842
      %846 = vrot.lane.b32.xlu0 %v845, 127
      %v847 = vpop.permute.xlu0 %846
      %v848 = vrot.slane %v847, 4
      %vm849 = vcmask 1039360
      %v850 = vsel %vm849, %v848, %v847
      %v853 = vmul.f32 %v833, %v850
      %v854 = vmul.f32 %v834, %v848
      %s855 = scalar_lea.vmem %s4, 12
      %v856 = vld [vmem:[%s855] sm:$0xf]
      %v859 = vcombine.high %v853, %v853
      %860 = vrot.lane.b32.xlu0 %v853, 1
      %v861 = vpop.permute.xlu0 %860
      %862 = vrot.lane.b32.xlu0 %v859, 1
      %v863 = vpop.permute.xlu0 %862
      %864 = vrot.lane.b32.xlu0 %v854, 1
      %v865 = vpop.permute.xlu0 %864
      %vm866 = vcmask 7168
      %v867 = vsel %vm866, %v861, %v863
      %v868 = vsel %vm866, %v863, %v865
      %v870 = vsel %vm391, %v856, 0
      %v872 = vsel %vm395, %v867, 0
      %v874 = vsel %vm395, %v868, 0
      %876 = vmatprep.subr.mxu0 0.0
      %877 = vmatpush1.msra.mxu0 0.0
      %878 = vmatprep.subr.mxu0 0.0
      %879 = vmatpush1.msra.mxu0 0.0
      %880 = vmatprep.subr.mxu0 0.0
      %881 = vmatpush1.msra.mxu0 0.0
      %882 = vmatprep.subr.mxu0 0.0
      %883 = vmatpush1.msra.mxu0 0.0
      %884 = vmatprep.subr.mxu0 0.0
      %885 = vmatpush1.msra.mxu0 0.0
      %886 = vmatprep.subr.mxu0 0.0
      %887 = vmatpush1.msra.mxu0 0.0
      %888 = vmatprep.subr.mxu0 0.0
      %889 = vmatpush1.msra.mxu0 0.0
      %890 = vmatprep.subr.mxu0 0.0
      %891 = vmatpush1.msra.mxu0 0.0
      %892 = vmatprep.subr.mxu0 0.0
      %893 = vmatpush1.msra.mxu0 0.0
      %894 = vmatprep.subr.mxu0 0.0
      %895 = vmatpush1.msra.mxu0 0.0
      %896 = vmatprep.subr.mxu0 0.0
      %897 = vmatpush1.msra.mxu0 0.0
      %898 = vmatprep.subr.mxu0 0.0
      %899 = vmatpush1.msra.mxu0 0.0
      %900 = vmatprep.subr.mxu0 0.0
      %901 = vmatpush1.msra.mxu0 0.0
      %902 = vmatprep.subr.mxu0 0.0
      %903 = vmatpush1.msra.mxu0 0.0
      %904 = vmatprep.subr.mxu0 0.0
      %905 = vmatpush1.msra.mxu0 0.0
      %906 = vmatprep.subr.mxu0 %v874
      %907 = vmatpush1.msra.mxu0 %v872
      %908 = vmatprep.subr.mxu0 0.0
      %909 = vmatpush2.msra.mxu0 0.0
      %910 = vmatprep.subr.mxu0 0.0
      %911 = vmatpush2.msra.mxu0 0.0
      %912 = vmatprep.subr.mxu0 0.0
      %913 = vmatpush2.msra.mxu0 0.0
      %914 = vmatprep.subr.mxu0 0.0
      %915 = vmatpush2.msra.mxu0 0.0
      %916 = vmatprep.subr.mxu0 0.0
      %917 = vmatpush2.msra.mxu0 0.0
      %918 = vmatprep.subr.mxu0 0.0
      %919 = vmatpush2.msra.mxu0 0.0
      %920 = vmatprep.subr.mxu0 0.0
      %921 = vmatpush2.msra.mxu0 0.0
      %922 = vmatprep.subr.mxu0 0.0
      %923 = vmatpush2.msra.mxu0 0.0
      %924 = vmatprep.subr.mxu0 0.0
      %925 = vmatpush2.msra.mxu0 0.0
      %926 = vmatprep.subr.mxu0 0.0
      %927 = vmatpush2.msra.mxu0 0.0
      %928 = vmatprep.subr.mxu0 0.0
      %929 = vmatpush2.msra.mxu0 0.0
      %930 = vmatprep.subr.mxu0 0.0
      %931 = vmatpush2.msra.mxu0 0.0
      %932 = vmatprep.subr.mxu0 0.0
      %933 = vmatpush2.msra.mxu0 0.0
      %934 = vmatprep.subr.mxu0 0.0
      %935 = vmatpush2.msra.mxu0 0.0
      %936 = vmatprep.subr.mxu0 0.0
      %937 = vmatpush2.msra.mxu0 0.0
      %938 = vmatprep.subr.mxu0 0.0
      %939 = vmatpush2.msra.mxu0 0.0
      %940 = vmatprep.mubr.f32.mxu0 0.0
      %941 = vmatmul.mubr.f32.gmra.mxu0 %v870
      %v942 = vpop.f32.mrf.mxu0
      %v943 = vadd.f32 0.0, %v942
      %v944 = vpop.f32.mrf.mxu0
      %v945 = vadd.f32 0.0, %v944
      %946 = vdwg.mxu0
      %v947 = vadd.f32 %v831, %v943
      %v948 = vadd.f32 %v832, %v945
      %v949 = vld [vmem:[#allocation2 + $0x4] sm:$0xff]
      %s950 = scalar_lea.vmem %s4, 16
      %v951 = vld [vmem:[%s950] sm:$0xf]
      %v953 = vcombine.high %v949, %v949
      %v955 = vsel %vm391, %v951, 0
      %v957 = vsel %vm395, %v949, 0
      %v959 = vsel %vm395, %v953, 0
      %961 = vmatprep.subr.mxu0 0.0
      %962 = vmatpush1.msra.mxu0 0.0
      %963 = vmatprep.subr.mxu0 0.0
      %964 = vmatpush1.msra.mxu0 0.0
      %965 = vmatprep.subr.mxu0 0.0
      %966 = vmatpush1.msra.mxu0 0.0
      %967 = vmatprep.subr.mxu0 0.0
      %968 = vmatpush1.msra.mxu0 0.0
      %969 = vmatprep.subr.mxu0 0.0
      %970 = vmatpush1.msra.mxu0 0.0
      %971 = vmatprep.subr.mxu0 0.0
      %972 = vmatpush1.msra.mxu0 0.0
      %973 = vmatprep.subr.mxu0 0.0
      %974 = vmatpush1.msra.mxu0 0.0
      %975 = vmatprep.subr.mxu0 0.0
      %976 = vmatpush1.msra.mxu0 0.0
      %977 = vmatprep.subr.mxu0 0.0
      %978 = vmatpush1.msra.mxu0 0.0
      %979 = vmatprep.subr.mxu0 0.0
      %980 = vmatpush1.msra.mxu0 0.0
      %981 = vmatprep.subr.mxu0 0.0
      %982 = vmatpush1.msra.mxu0 0.0
      %983 = vmatprep.subr.mxu0 0.0
      %984 = vmatpush1.msra.mxu0 0.0
      %985 = vmatprep.subr.mxu0 0.0
      %986 = vmatpush1.msra.mxu0 0.0
      %987 = vmatprep.subr.mxu0 0.0
      %988 = vmatpush1.msra.mxu0 0.0
      %989 = vmatprep.subr.mxu0 0.0
      %990 = vmatpush1.msra.mxu0 0.0
      %991 = vmatprep.subr.mxu0 %v959
      %992 = vmatpush1.msra.mxu0 %v957
      %993 = vmatprep.subr.mxu0 0.0
      %994 = vmatpush2.msra.mxu0 0.0
      %995 = vmatprep.subr.mxu0 0.0
      %996 = vmatpush2.msra.mxu0 0.0
      %997 = vmatprep.subr.mxu0 0.0
      %998 = vmatpush2.msra.mxu0 0.0
      %999 = vmatprep.subr.mxu0 0.0
      %1000 = vmatpush2.msra.mxu0 0.0
      %1001 = vmatprep.subr.mxu0 0.0
      %1002 = vmatpush2.msra.mxu0 0.0
      %1003 = vmatprep.subr.mxu0 0.0
      %1004 = vmatpush2.msra.mxu0 0.0
      %1005 = vmatprep.subr.mxu0 0.0
      %1006 = vmatpush2.msra.mxu0 0.0
      %1007 = vmatprep.subr.mxu0 0.0
      %1008 = vmatpush2.msra.mxu0 0.0
      %1009 = vmatprep.subr.mxu0 0.0
      %1010 = vmatpush2.msra.mxu0 0.0
      %1011 = vmatprep.subr.mxu0 0.0
      %1012 = vmatpush2.msra.mxu0 0.0
      %1013 = vmatprep.subr.mxu0 0.0
      %1014 = vmatpush2.msra.mxu0 0.0
      %1015 = vmatprep.subr.mxu0 0.0
      %1016 = vmatpush2.msra.mxu0 0.0
      %1017 = vmatprep.subr.mxu0 0.0
      %1018 = vmatpush2.msra.mxu0 0.0
      %1019 = vmatprep.subr.mxu0 0.0
      %1020 = vmatpush2.msra.mxu0 0.0
      %1021 = vmatprep.subr.mxu0 0.0
      %1022 = vmatpush2.msra.mxu0 0.0
      %1023 = vmatprep.subr.mxu0 0.0
      %1024 = vmatpush2.msra.mxu0 0.0
      %1025 = vmatprep.mubr.f32.mxu0 0.0
      %1026 = vmatmul.mubr.f32.gmra.mxu0 %v955
      %v1027 = vpop.f32.mrf.mxu0
      %v1028 = vadd.f32 0.0, %v1027
      %v1029 = vpop.f32.mrf.mxu0
      %v1030 = vadd.f32 0.0, %v1029
      %1031 = vdwg.mxu0
      %v1032 = vadd.f32 %v947, %v1028
      %v1033 = vadd.f32 %v948, %v1030
      %v1034 = vld [vmem:[#allocation2 + $0x4] sm:$0xff]
      %v1035 = vld [vmem:[#allocation2 + $0xc] sm:$0xf]
      %v1036 = vlaneseq
      %v1037 = vshrl.u32 %v1036, 7
      %v1038 = vsub.s32 5, %v1037
      %v1039 = vrot.slane %v379, %v1038
      %v1040 = vlaneseq
      %v1041 = vshrl.u32 %v1040, 7
      %v1042 = vsub.s32 5, %v1041
      %v1043 = vrot.slane %v380, %v1042
      %v1046 = vcombine.low %v1039, %v1043
      %1047 = vrot.lane.b32.xlu0 %v1046, 1
      %v1048 = vpop.permute.xlu0 %1047
      %v1049 = vrot.slane %v1048, 4
      %v1050 = vsel %vm866, %v1049, %v1048
      %v1053 = vmul.f32 %v1034, %v1050
      %v1054 = vmul.f32 %v1035, %v1049
      %s1055 = scalar_lea.vmem %s4, 20
      %v1056 = vld [vmem:[%s1055] sm:$0xf]
      %v1059 = vcombine.high %v1053, %v1053
      %1060 = vrot.lane.b32.xlu0 %v1053, 127
      %v1061 = vpop.permute.xlu0 %1060
      %1062 = vrot.lane.b32.xlu0 %v1059, 127
      %v1063 = vpop.permute.xlu0 %1062
      %1064 = vrot.lane.b32.xlu0 %v1054, 127
      %v1065 = vpop.permute.xlu0 %1064
      %v1066 = vsel %vm849, %v1061, %v1063
      %v1067 = vsel %vm849, %v1063, %v1065
      %v1069 = vsel %vm391, %v1056, 0
      %v1071 = vsel %vm395, %v1066, 0
      %v1073 = vsel %vm395, %v1067, 0
      %1075 = vmatprep.subr.mxu0 0.0
      %1076 = vmatpush1.msra.mxu0 0.0
      %1077 = vmatprep.subr.mxu0 0.0
      %1078 = vmatpush1.msra.mxu0 0.0
      %1079 = vmatprep.subr.mxu0 0.0
      %1080 = vmatpush1.msra.mxu0 0.0
      %1081 = vmatprep.subr.mxu0 0.0
      %1082 = vmatpush1.msra.mxu0 0.0
      %1083 = vmatprep.subr.mxu0 0.0
      %1084 = vmatpush1.msra.mxu0 0.0
      %1085 = vmatprep.subr.mxu0 0.0
      %1086 = vmatpush1.msra.mxu0 0.0
      %1087 = vmatprep.subr.mxu0 0.0
      %1088 = vmatpush1.msra.mxu0 0.0
      %1089 = vmatprep.subr.mxu0 0.0
      %1090 = vmatpush1.msra.mxu0 0.0
      %1091 = vmatprep.subr.mxu0 0.0
      %1092 = vmatpush1.msra.mxu0 0.0
      %1093 = vmatprep.subr.mxu0 0.0
      %1094 = vmatpush1.msra.mxu0 0.0
      %1095 = vmatprep.subr.mxu0 0.0
      %1096 = vmatpush1.msra.mxu0 0.0
      %1097 = vmatprep.subr.mxu0 0.0
      %1098 = vmatpush1.msra.mxu0 0.0
      %1099 = vmatprep.subr.mxu0 0.0
      %1100 = vmatpush1.msra.mxu0 0.0
      %1101 = vmatprep.subr.mxu0 0.0
      %1102 = vmatpush1.msra.mxu0 0.0
      %1103 = vmatprep.subr.mxu0 0.0
      %1104 = vmatpush1.msra.mxu0 0.0
      %1105 = vmatprep.subr.mxu0 %v1073
      %1106 = vmatpush1.msra.mxu0 %v1071
      %1107 = vmatprep.subr.mxu0 0.0
      %1108 = vmatpush2.msra.mxu0 0.0
      %1109 = vmatprep.subr.mxu0 0.0
      %1110 = vmatpush2.msra.mxu0 0.0
      %1111 = vmatprep.subr.mxu0 0.0
      %1112 = vmatpush2.msra.mxu0 0.0
      %1113 = vmatprep.subr.mxu0 0.0
      %1114 = vmatpush2.msra.mxu0 0.0
      %1115 = vmatprep.subr.mxu0 0.0
      %1116 = vmatpush2.msra.mxu0 0.0
      %1117 = vmatprep.subr.mxu0 0.0
      %1118 = vmatpush2.msra.mxu0 0.0
      %1119 = vmatprep.subr.mxu0 0.0
      %1120 = vmatpush2.msra.mxu0 0.0
      %1121 = vmatprep.subr.mxu0 0.0
      %1122 = vmatpush2.msra.mxu0 0.0
      %1123 = vmatprep.subr.mxu0 0.0
      %1124 = vmatpush2.msra.mxu0 0.0
      %1125 = vmatprep.subr.mxu0 0.0
      %1126 = vmatpush2.msra.mxu0 0.0
      %1127 = vmatprep.subr.mxu0 0.0
      %1128 = vmatpush2.msra.mxu0 0.0
      %1129 = vmatprep.subr.mxu0 0.0
      %1130 = vmatpush2.msra.mxu0 0.0
      %1131 = vmatprep.subr.mxu0 0.0
      %1132 = vmatpush2.msra.mxu0 0.0
      %1133 = vmatprep.subr.mxu0 0.0
      %1134 = vmatpush2.msra.mxu0 0.0
      %1135 = vmatprep.subr.mxu0 0.0
      %1136 = vmatpush2.msra.mxu0 0.0
      %1137 = vmatprep.subr.mxu0 0.0
      %1138 = vmatpush2.msra.mxu0 0.0
      %1139 = vmatprep.mubr.f32.mxu0 0.0
      %1140 = vmatmul.mubr.f32.gmra.mxu0 %v1069
      %v1141 = vpop.f32.mrf.mxu0
      %v1142 = vadd.f32 0.0, %v1141
      %v1143 = vpop.f32.mrf.mxu0
      %v1144 = vadd.f32 0.0, %v1143
      %1145 = vdwg.mxu0
      %v1146 = vadd.f32 %v1032, %v1142
      %v1147 = vadd.f32 %v1033, %v1144
      %v1148 = vld [vmem:[#allocation2 + $0x4] sm:$0xff]
      %v1149 = vld [vmem:[#allocation2 + $0xc] sm:$0xf]
      %v1150 = vlaneseq
      %v1151 = vshrl.u32 %v1150, 7
      %v1152 = vsub.s32 6, %v1151
      %v1153 = vrot.slane %v379, %v1152
      %v1154 = vlaneseq
      %v1155 = vshrl.u32 %v1154, 7
      %v1156 = vsub.s32 6, %v1155
      %v1157 = vrot.slane %v380, %v1156
      %v1160 = vcombine.low %v1153, %v1157
      %1161 = vrot.lane.b32.xlu0 %v1160, 15
      %v1162 = vpop.permute.xlu0 %1161
      %v1163 = vrot.slane %v1162, 4
      %v1164 = vsel %vm750, %v1163, %v1162
      %v1167 = vmul.f32 %v1148, %v1164
      %v1168 = vmul.f32 %v1149, %v1163
      %s1169 = scalar_lea.vmem %s4, 24
      %v1170 = vld [vmem:[%s1169] sm:$0xf]
      %v1173 = vcombine.high %v1167, %v1167
      %1174 = vrot.lane.b32.xlu0 %v1167, 113
      %v1175 = vpop.permute.xlu0 %1174
      %1176 = vrot.lane.b32.xlu0 %v1173, 113
      %v1177 = vpop.permute.xlu0 %1176
      %1178 = vrot.lane.b32.xlu0 %v1168, 113
      %v1179 = vpop.permute.xlu0 %1178
      %v1180 = vsel %vm733, %v1175, %v1177
      %v1181 = vsel %vm733, %v1177, %v1179
      %v1183 = vsel %vm391, %v1170, 0
      %v1185 = vsel %vm395, %v1180, 0
      %v1187 = vsel %vm395, %v1181, 0
      %1189 = vmatprep.subr.mxu0 0.0
      %1190 = vmatpush1.msra.mxu0 0.0
      %1191 = vmatprep.subr.mxu0 0.0
      %1192 = vmatpush1.msra.mxu0 0.0
      %1193 = vmatprep.subr.mxu0 0.0
      %1194 = vmatpush1.msra.mxu0 0.0
      %1195 = vmatprep.subr.mxu0 0.0
      %1196 = vmatpush1.msra.mxu0 0.0
      %1197 = vmatprep.subr.mxu0 0.0
      %1198 = vmatpush1.msra.mxu0 0.0
      %1199 = vmatprep.subr.mxu0 0.0
      %1200 = vmatpush1.msra.mxu0 0.0
      %1201 = vmatprep.subr.mxu0 0.0
      %1202 = vmatpush1.msra.mxu0 0.0
      %1203 = vmatprep.subr.mxu0 0.0
      %1204 = vmatpush1.msra.mxu0 0.0
      %1205 = vmatprep.subr.mxu0 0.0
      %1206 = vmatpush1.msra.mxu0 0.0
      %1207 = vmatprep.subr.mxu0 0.0
      %1208 = vmatpush1.msra.mxu0 0.0
      %1209 = vmatprep.subr.mxu0 0.0
      %1210 = vmatpush1.msra.mxu0 0.0
      %1211 = vmatprep.subr.mxu0 0.0
      %1212 = vmatpush1.msra.mxu0 0.0
      %1213 = vmatprep.subr.mxu0 0.0
      %1214 = vmatpush1.msra.mxu0 0.0
      %1215 = vmatprep.subr.mxu0 0.0
      %1216 = vmatpush1.msra.mxu0 0.0
      %1217 = vmatprep.subr.mxu0 0.0
      %1218 = vmatpush1.msra.mxu0 0.0
      %1219 = vmatprep.subr.mxu0 %v1187
      %1220 = vmatpush1.msra.mxu0 %v1185
      %1221 = vmatprep.subr.mxu0 0.0
      %1222 = vmatpush2.msra.mxu0 0.0
      %1223 = vmatprep.subr.mxu0 0.0
      %1224 = vmatpush2.msra.mxu0 0.0
      %1225 = vmatprep.subr.mxu0 0.0
      %1226 = vmatpush2.msra.mxu0 0.0
      %1227 = vmatprep.subr.mxu0 0.0
      %1228 = vmatpush2.msra.mxu0 0.0
      %1229 = vmatprep.subr.mxu0 0.0
      %1230 = vmatpush2.msra.mxu0 0.0
      %1231 = vmatprep.subr.mxu0 0.0
      %1232 = vmatpush2.msra.mxu0 0.0
      %1233 = vmatprep.subr.mxu0 0.0
      %1234 = vmatpush2.msra.mxu0 0.0
      %1235 = vmatprep.subr.mxu0 0.0
      %1236 = vmatpush2.msra.mxu0 0.0
      %1237 = vmatprep.subr.mxu0 0.0
      %1238 = vmatpush2.msra.mxu0 0.0
      %1239 = vmatprep.subr.mxu0 0.0
      %1240 = vmatpush2.msra.mxu0 0.0
      %1241 = vmatprep.subr.mxu0 0.0
      %1242 = vmatpush2.msra.mxu0 0.0
      %1243 = vmatprep.subr.mxu0 0.0
      %1244 = vmatpush2.msra.mxu0 0.0
      %1245 = vmatprep.subr.mxu0 0.0
      %1246 = vmatpush2.msra.mxu0 0.0
      %1247 = vmatprep.subr.mxu0 0.0
      %1248 = vmatpush2.msra.mxu0 0.0
      %1249 = vmatprep.subr.mxu0 0.0
      %1250 = vmatpush2.msra.mxu0 0.0
      %1251 = vmatprep.subr.mxu0 0.0
      %1252 = vmatpush2.msra.mxu0 0.0
      %1253 = vmatprep.mubr.f32.mxu0 0.0
      %1254 = vmatmul.mubr.f32.gmra.mxu0 %v1183
      %v1255 = vpop.f32.mrf.mxu0
      %v1256 = vadd.f32 0.0, %v1255
      %v1257 = vpop.f32.mrf.mxu0
      %v1258 = vadd.f32 0.0, %v1257
      %1259 = vdwg.mxu0
      %v1260 = vadd.f32 %v1146, %v1256
      %v1261 = vadd.f32 %v1147, %v1258
      %v1262 = vld [vmem:[#allocation2 + $0x4] sm:$0xff]
      %v1263 = vld [vmem:[#allocation2 + $0xc] sm:$0xf]
      %v1264 = vlaneseq
      %v1265 = vshrl.u32 %v1264, 7
      %v1266 = vsub.s32 7, %v1265
      %v1267 = vrot.slane %v379, %v1266
      %v1268 = vlaneseq
      %v1269 = vshrl.u32 %v1268, 7
      %v1270 = vsub.s32 7, %v1269
      %v1271 = vrot.slane %v380, %v1270
      %v1274 = vcombine.low %v1267, %v1271
      %1275 = vrot.lane.b32.xlu0 %v1274, 16
      %v1276 = vpop.permute.xlu0 %1275
      %v1277 = vrot.slane %v1276, 4
      %v1278 = vsel %vm546, %v1277, %v1276
      %v1281 = vmul.f32 %v1262, %v1278
      %v1282 = vmul.f32 %v1263, %v1277
      %s1283 = scalar_lea.vmem %s4, 28
      %v1284 = vld [vmem:[%s1283] sm:$0xf]
      %v1287 = vcombine.high %v1281, %v1281
      %1288 = vrot.lane.b32.xlu0 %v1281, 112
      %v1289 = vpop.permute.xlu0 %1288
      %1290 = vrot.lane.b32.xlu0 %v1287, 112
      %v1291 = vpop.permute.xlu0 %1290
      %1292 = vrot.lane.b32.xlu0 %v1282, 112
      %v1293 = vpop.permute.xlu0 %1292
      %v1294 = vsel %vm529, %v1289, %v1291
      %v1295 = vsel %vm529, %v1291, %v1293
      %v1297 = vsel %vm391, %v1284, 0
      %v1299 = vsel %vm395, %v1294, 0
      %v1301 = vsel %vm395, %v1295, 0
      %1303 = vmatprep.subr.mxu0 0.0
      %1304 = vmatpush1.msra.mxu0 0.0
      %1305 = vmatprep.subr.mxu0 0.0
      %1306 = vmatpush1.msra.mxu0 0.0
      %1307 = vmatprep.subr.mxu0 0.0
      %1308 = vmatpush1.msra.mxu0 0.0
      %1309 = vmatprep.subr.mxu0 0.0
      %1310 = vmatpush1.msra.mxu0 0.0
      %1311 = vmatprep.subr.mxu0 0.0
      %1312 = vmatpush1.msra.mxu0 0.0
      %1313 = vmatprep.subr.mxu0 0.0
      %1314 = vmatpush1.msra.mxu0 0.0
      %1315 = vmatprep.subr.mxu0 0.0
      %1316 = vmatpush1.msra.mxu0 0.0
      %1317 = vmatprep.subr.mxu0 0.0
      %1318 = vmatpush1.msra.mxu0 0.0
      %1319 = vmatprep.subr.mxu0 0.0
      %1320 = vmatpush1.msra.mxu0 0.0
      %1321 = vmatprep.subr.mxu0 0.0
      %1322 = vmatpush1.msra.mxu0 0.0
      %1323 = vmatprep.subr.mxu0 0.0
      %1324 = vmatpush1.msra.mxu0 0.0
      %1325 = vmatprep.subr.mxu0 0.0
      %1326 = vmatpush1.msra.mxu0 0.0
      %1327 = vmatprep.subr.mxu0 0.0
      %1328 = vmatpush1.msra.mxu0 0.0
      %1329 = vmatprep.subr.mxu0 0.0
      %1330 = vmatpush1.msra.mxu0 0.0
      %1331 = vmatprep.subr.mxu0 0.0
      %1332 = vmatpush1.msra.mxu0 0.0
      %1333 = vmatprep.subr.mxu0 %v1301
      %1334 = vmatpush1.msra.mxu0 %v1299
      %1335 = vmatprep.subr.mxu0 0.0
      %1336 = vmatpush2.msra.mxu0 0.0
      %1337 = vmatprep.subr.mxu0 0.0
      %1338 = vmatpush2.msra.mxu0 0.0
      %1339 = vmatprep.subr.mxu0 0.0
      %1340 = vmatpush2.msra.mxu0 0.0
      %1341 = vmatprep.subr.mxu0 0.0
      %1342 = vmatpush2.msra.mxu0 0.0
      %1343 = vmatprep.subr.mxu0 0.0
      %1344 = vmatpush2.msra.mxu0 0.0
      %1345 = vmatprep.subr.mxu0 0.0
      %1346 = vmatpush2.msra.mxu0 0.0
      %1347 = vmatprep.subr.mxu0 0.0
      %1348 = vmatpush2.msra.mxu0 0.0
      %1349 = vmatprep.subr.mxu0 0.0
      %1350 = vmatpush2.msra.mxu0 0.0
      %1351 = vmatprep.subr.mxu0 0.0
      %1352 = vmatpush2.msra.mxu0 0.0
      %1353 = vmatprep.subr.mxu0 0.0
      %1354 = vmatpush2.msra.mxu0 0.0
      %1355 = vmatprep.subr.mxu0 0.0
      %1356 = vmatpush2.msra.mxu0 0.0
      %1357 = vmatprep.subr.mxu0 0.0
      %1358 = vmatpush2.msra.mxu0 0.0
      %1359 = vmatprep.subr.mxu0 0.0
      %1360 = vmatpush2.msra.mxu0 0.0
      %1361 = vmatprep.subr.mxu0 0.0
      %1362 = vmatpush2.msra.mxu0 0.0
      %1363 = vmatprep.subr.mxu0 0.0
      %1364 = vmatpush2.msra.mxu0 0.0
      %1365 = vmatprep.subr.mxu0 0.0
      %1366 = vmatpush2.msra.mxu0 0.0
      %1367 = vmatprep.mubr.f32.mxu0 0.0
      %1368 = vmatmul.mubr.f32.gmra.mxu0 %v1297
      %v1369 = vpop.f32.mrf.mxu0
      %v1370 = vadd.f32 0.0, %v1369
      %v1371 = vpop.f32.mrf.mxu0
      %v1372 = vadd.f32 0.0, %v1371
      %1373 = vdwg.mxu0
      %v1374 = vadd.f32 %v1260, %v1370
      %v1375 = vadd.f32 %v1261, %v1372
      %v1376 = vld [vmem:[#allocation2 + $0x4] sm:$0xff]
      %v1377 = vld [vmem:[#allocation2 + $0xc] sm:$0xf]
      %v1378 = vlaneseq
      %v1379 = vshrl.u32 %v1378, 7
      %v1380 = vsub.s32 0, %v1379
      %v1381 = vrot.slane %v381, %v1380
      %v1382 = vlaneseq
      %v1383 = vshrl.u32 %v1382, 7
      %v1384 = vsub.s32 0, %v1383
      %v1385 = vrot.slane %v382, %v1384
      %v1388 = vcombine.low %v1381, %v1385
      %1389 = vrot.lane.b32.xlu0 %v1388, 17
      %v1390 = vpop.permute.xlu0 %1389
      %v1391 = vrot.slane %v1390, 4
      %v1392 = vsel %vm636, %v1391, %v1390
      %v1395 = vmul.f32 %v1376, %v1392
      %v1396 = vmul.f32 %v1377, %v1391
      %s1397 = scalar_lea.vmem %s4, 32
      %v1398 = vld [vmem:[%s1397] sm:$0xf]
      %v1401 = vcombine.high %v1395, %v1395
      %1402 = vrot.lane.b32.xlu0 %v1395, 111
      %v1403 = vpop.permute.xlu0 %1402
      %1404 = vrot.lane.b32.xlu0 %v1401, 111
      %v1405 = vpop.permute.xlu0 %1404
      %1406 = vrot.lane.b32.xlu0 %v1396, 111
      %v1407 = vpop.permute.xlu0 %1406
      %v1408 = vsel %vm508, %v1403, %v1405
      %v1409 = vsel %vm508, %v1405, %v1407
      %v1411 = vsel %vm391, %v1398, 0
      %v1413 = vsel %vm395, %v1408, 0
      %v1415 = vsel %vm395, %v1409, 0
      %1417 = vmatprep.subr.mxu0 0.0
      %1418 = vmatpush1.msra.mxu0 0.0
      %1419 = vmatprep.subr.mxu0 0.0
      %1420 = vmatpush1.msra.mxu0 0.0
      %1421 = vmatprep.subr.mxu0 0.0
      %1422 = vmatpush1.msra.mxu0 0.0
      %1423 = vmatprep.subr.mxu0 0.0
      %1424 = vmatpush1.msra.mxu0 0.0
      %1425 = vmatprep.subr.mxu0 0.0
      %1426 = vmatpush1.msra.mxu0 0.0
      %1427 = vmatprep.subr.mxu0 0.0
      %1428 = vmatpush1.msra.mxu0 0.0
      %1429 = vmatprep.subr.mxu0 0.0
      %1430 = vmatpush1.msra.mxu0 0.0
      %1431 = vmatprep.subr.mxu0 0.0
      %1432 = vmatpush1.msra.mxu0 0.0
      %1433 = vmatprep.subr.mxu0 0.0
      %1434 = vmatpush1.msra.mxu0 0.0
      %1435 = vmatprep.subr.mxu0 0.0
      %1436 = vmatpush1.msra.mxu0 0.0
      %1437 = vmatprep.subr.mxu0 0.0
      %1438 = vmatpush1.msra.mxu0 0.0
      %1439 = vmatprep.subr.mxu0 0.0
      %1440 = vmatpush1.msra.mxu0 0.0
      %1441 = vmatprep.subr.mxu0 0.0
      %1442 = vmatpush1.msra.mxu0 0.0
      %1443 = vmatprep.subr.mxu0 0.0
      %1444 = vmatpush1.msra.mxu0 0.0
      %1445 = vmatprep.subr.mxu0 0.0
      %1446 = vmatpush1.msra.mxu0 0.0
      %1447 = vmatprep.subr.mxu0 %v1415
      %1448 = vmatpush1.msra.mxu0 %v1413
      %1449 = vmatprep.subr.mxu0 0.0
      %1450 = vmatpush2.msra.mxu0 0.0
      %1451 = vmatprep.subr.mxu0 0.0
      %1452 = vmatpush2.msra.mxu0 0.0
      %1453 = vmatprep.subr.mxu0 0.0
      %1454 = vmatpush2.msra.mxu0 0.0
      %1455 = vmatprep.subr.mxu0 0.0
      %1456 = vmatpush2.msra.mxu0 0.0
      %1457 = vmatprep.subr.mxu0 0.0
      %1458 = vmatpush2.msra.mxu0 0.0
      %1459 = vmatprep.subr.mxu0 0.0
      %1460 = vmatpush2.msra.mxu0 0.0
      %1461 = vmatprep.subr.mxu0 0.0
      %1462 = vmatpush2.msra.mxu0 0.0
      %1463 = vmatprep.subr.mxu0 0.0
      %1464 = vmatpush2.msra.mxu0 0.0
      %1465 = vmatprep.subr.mxu0 0.0
      %1466 = vmatpush2.msra.mxu0 0.0
      %1467 = vmatprep.subr.mxu0 0.0
      %1468 = vmatpush2.msra.mxu0 0.0
      %1469 = vmatprep.subr.mxu0 0.0
      %1470 = vmatpush2.msra.mxu0 0.0
      %1471 = vmatprep.subr.mxu0 0.0
      %1472 = vmatpush2.msra.mxu0 0.0
      %1473 = vmatprep.subr.mxu0 0.0
      %1474 = vmatpush2.msra.mxu0 0.0
      %1475 = vmatprep.subr.mxu0 0.0
      %1476 = vmatpush2.msra.mxu0 0.0
      %1477 = vmatprep.subr.mxu0 0.0
      %1478 = vmatpush2.msra.mxu0 0.0
      %1479 = vmatprep.subr.mxu0 0.0
      %1480 = vmatpush2.msra.mxu0 0.0
      %1481 = vmatprep.mubr.f32.mxu0 0.0
      %1482 = vmatmul.mubr.f32.gmra.mxu0 %v1411
      %v1483 = vpop.f32.mrf.mxu0
      %v1484 = vadd.f32 0.0, %v1483
      %v1485 = vpop.f32.mrf.mxu0
      %v1486 = vadd.f32 0.0, %v1485
      %1487 = vdwg.mxu0
      %v1488 = vadd.f32 %v1374, %v1484
      %v1489 = vadd.f32 %v1375, %v1486
      %1491 = vset.pattern.permute.xlu0 0
      %1492 = vperm.xlu0 %1491, %v384
      %v1493 = vpop.permute.xlu0 %1492
      %v1495 = vadd.f32 %v1488, %v1493
      %v1496 = vadd.f32 %v1489, %v1493
      %v1497 = vxor.u32 %v1495, 2147483648
      %v1498 = vxor.u32 %v1496, 2147483648
      %v1499 = vmul.f32 %v1497, 1.442695
      %v1500 = vpow.pop %v1499
      %v1501 = vmul.f32 %v1498, 1.442695
      %v1502 = vpow.pop %v1501
      %v1503 = vadd.f32 %v1500, 1.0
      %v1504 = vadd.f32 %v1502, 1.0
      %v1505 = vrcp.pop %v1503
      %v1506 = vmul.f32 1.0, %v1505
      %v1507 = vrcp.pop %v1504
      %v1508 = vmul.f32 1.0, %v1507
      %v1509 = vmul.f32 %v1495, %v1506
      %v1510 = vmul.f32 %v1496, %v1508
      %v1511 = vadd.f32 %v375, %v1509
      %v1512 = vadd.f32 %v376, %v1510
      %v1513 = vld [vmem:[%s6 + $0x18] sm:$0xff]
      %v1514 = vld [vmem:[%s5] sm:$0xff]
      %1516 = vrot.lane.b32.xlu0 %v1514, 124
      %v1517 = vpop.permute.xlu0 %1516
      %v1518 = vrot.slane %v375, 4
      %v1519 = vrot.slane %v376, 4
      %v1520 = vsel %vm391, %v1517, 0
      %v1522 = vsel %vm395, %v1518, 0
      %v1524 = vsel %vm395, %v1519, 0
      %1526 = vmatprep.subr.mxu0 0.0
      %1527 = vmatpush1.msra.mxu0 0.0
      %1528 = vmatprep.subr.mxu0 0.0
      %1529 = vmatpush1.msra.mxu0 0.0
      %1530 = vmatprep.subr.mxu0 0.0
      %1531 = vmatpush1.msra.mxu0 0.0
      %1532 = vmatprep.subr.mxu0 0.0
      %1533 = vmatpush1.msra.mxu0 0.0
      %1534 = vmatprep.subr.mxu0 0.0
      %1535 = vmatpush1.msra.mxu0 0.0
      %1536 = vmatprep.subr.mxu0 0.0
      %1537 = vmatpush1.msra.mxu0 0.0
      %1538 = vmatprep.subr.mxu0 0.0
      %1539 = vmatpush1.msra.mxu0 0.0
      %1540 = vmatprep.subr.mxu0 0.0
      %1541 = vmatpush1.msra.mxu0 0.0
      %1542 = vmatprep.subr.mxu0 0.0
      %1543 = vmatpush1.msra.mxu0 0.0
      %1544 = vmatprep.subr.mxu0 0.0
      %1545 = vmatpush1.msra.mxu0 0.0
      %1546 = vmatprep.subr.mxu0 0.0
      %1547 = vmatpush1.msra.mxu0 0.0
      %1548 = vmatprep.subr.mxu0 0.0
      %1549 = vmatpush1.msra.mxu0 0.0
      %1550 = vmatprep.subr.mxu0 0.0
      %1551 = vmatpush1.msra.mxu0 0.0
      %1552 = vmatprep.subr.mxu0 0.0
      %1553 = vmatpush1.msra.mxu0 0.0
      %1554 = vmatprep.subr.mxu0 0.0
      %1555 = vmatpush1.msra.mxu0 0.0
      %1556 = vmatprep.subr.mxu0 %v1524
      %1557 = vmatpush1.msra.mxu0 %v1522
      %1558 = vmatprep.subr.mxu0 0.0
      %1559 = vmatpush2.msra.mxu0 0.0
      %1560 = vmatprep.subr.mxu0 0.0
      %1561 = vmatpush2.msra.mxu0 0.0
      %1562 = vmatprep.subr.mxu0 0.0
      %1563 = vmatpush2.msra.mxu0 0.0
      %1564 = vmatprep.subr.mxu0 0.0
      %1565 = vmatpush2.msra.mxu0 0.0
      %1566 = vmatprep.subr.mxu0 0.0
      %1567 = vmatpush2.msra.mxu0 0.0
      %1568 = vmatprep.subr.mxu0 0.0
      %1569 = vmatpush2.msra.mxu0 0.0
      %1570 = vmatprep.subr.mxu0 0.0
      %1571 = vmatpush2.msra.mxu0 0.0
      %1572 = vmatprep.subr.mxu0 0.0
      %1573 = vmatpush2.msra.mxu0 0.0
      %1574 = vmatprep.subr.mxu0 0.0
      %1575 = vmatpush2.msra.mxu0 0.0
      %1576 = vmatprep.subr.mxu0 0.0
      %1577 = vmatpush2.msra.mxu0 0.0
      %1578 = vmatprep.subr.mxu0 0.0
      %1579 = vmatpush2.msra.mxu0 0.0
      %1580 = vmatprep.subr.mxu0 0.0
      %1581 = vmatpush2.msra.mxu0 0.0
      %1582 = vmatprep.subr.mxu0 0.0
      %1583 = vmatpush2.msra.mxu0 0.0
      %1584 = vmatprep.subr.mxu0 0.0
      %1585 = vmatpush2.msra.mxu0 0.0
      %1586 = vmatprep.subr.mxu0 0.0
      %1587 = vmatpush2.msra.mxu0 0.0
      %1588 = vmatprep.subr.mxu0 0.0
      %1589 = vmatpush2.msra.mxu0 0.0
      %1590 = vmatprep.mubr.f32.mxu0 0.0
      %1591 = vmatmul.mubr.f32.gmra.mxu0 %v1520
      %v1592 = vpop.f32.mrf.mxu0
      %v1593 = vadd.f32 0.0, %v1592
      %v1594 = vpop.f32.mrf.mxu0
      %v1595 = vadd.f32 0.0, %v1594
      %1596 = vdwg.mxu0
      %v1597 = vsel %vm391, %v1514, 0
      %v1600 = vsel %vm395, %v1511, 0
      %v1603 = vsel %vm395, %v1512, 0
      %1605 = vmatprep.subr.mxu0 0.0
      %1606 = vmatpush1.msra.mxu0 0.0
      %1607 = vmatprep.subr.mxu0 0.0
      %1608 = vmatpush1.msra.mxu0 0.0
      %1609 = vmatprep.subr.mxu0 0.0
      %1610 = vmatpush1.msra.mxu0 0.0
      %1611 = vmatprep.subr.mxu0 0.0
      %1612 = vmatpush1.msra.mxu0 0.0
      %1613 = vmatprep.subr.mxu0 0.0
      %1614 = vmatpush1.msra.mxu0 0.0
      %1615 = vmatprep.subr.mxu0 0.0
      %1616 = vmatpush1.msra.mxu0 0.0
      %1617 = vmatprep.subr.mxu0 0.0
      %1618 = vmatpush1.msra.mxu0 0.0
      %1619 = vmatprep.subr.mxu0 0.0
      %1620 = vmatpush1.msra.mxu0 0.0
      %1621 = vmatprep.subr.mxu0 0.0
      %1622 = vmatpush1.msra.mxu0 0.0
      %1623 = vmatprep.subr.mxu0 0.0
      %1624 = vmatpush1.msra.mxu0 0.0
      %1625 = vmatprep.subr.mxu0 0.0
      %1626 = vmatpush1.msra.mxu0 0.0
      %1627 = vmatprep.subr.mxu0 0.0
      %1628 = vmatpush1.msra.mxu0 0.0
      %1629 = vmatprep.subr.mxu0 0.0
      %1630 = vmatpush1.msra.mxu0 0.0
      %1631 = vmatprep.subr.mxu0 0.0
      %1632 = vmatpush1.msra.mxu0 0.0
      %1633 = vmatprep.subr.mxu0 0.0
      %1634 = vmatpush1.msra.mxu0 0.0
      %1635 = vmatprep.subr.mxu0 %v1603
      %1636 = vmatpush1.msra.mxu0 %v1600
      %1637 = vmatprep.subr.mxu0 0.0
      %1638 = vmatpush2.msra.mxu0 0.0
      %1639 = vmatprep.subr.mxu0 0.0
      %1640 = vmatpush2.msra.mxu0 0.0
      %1641 = vmatprep.subr.mxu0 0.0
      %1642 = vmatpush2.msra.mxu0 0.0
      %1643 = vmatprep.subr.mxu0 0.0
      %1644 = vmatpush2.msra.mxu0 0.0
      %1645 = vmatprep.subr.mxu0 0.0
      %1646 = vmatpush2.msra.mxu0 0.0
      %1647 = vmatprep.subr.mxu0 0.0
      %1648 = vmatpush2.msra.mxu0 0.0
      %1649 = vmatprep.subr.mxu0 0.0
      %1650 = vmatpush2.msra.mxu0 0.0
      %1651 = vmatprep.subr.mxu0 0.0
      %1652 = vmatpush2.msra.mxu0 0.0
      %1653 = vmatprep.subr.mxu0 0.0
      %1654 = vmatpush2.msra.mxu0 0.0
      %1655 = vmatprep.subr.mxu0 0.0
      %1656 = vmatpush2.msra.mxu0 0.0
      %1657 = vmatprep.subr.mxu0 0.0
      %1658 = vmatpush2.msra.mxu0 0.0
      %1659 = vmatprep.subr.mxu0 0.0
      %1660 = vmatpush2.msra.mxu0 0.0
      %1661 = vmatprep.subr.mxu0 0.0
      %1662 = vmatpush2.msra.mxu0 0.0
      %1663 = vmatprep.subr.mxu0 0.0
      %1664 = vmatpush2.msra.mxu0 0.0
      %1665 = vmatprep.subr.mxu0 0.0
      %1666 = vmatpush2.msra.mxu0 0.0
      %1667 = vmatprep.subr.mxu0 0.0
      %1668 = vmatpush2.msra.mxu0 0.0
      %1669 = vmatprep.mubr.f32.mxu0 0.0
      %1670 = vmatmul.mubr.f32.gmra.mxu0 %v1597
      %v1671 = vpop.f32.mrf.mxu0
      %v1672 = vadd.f32 %v1593, %v1671
      %v1673 = vpop.f32.mrf.mxu0
      %v1674 = vadd.f32 %v1595, %v1673
      %1675 = vdwg.mxu0
      %1677 = vset.pattern.permute.xlu0 0
      %1678 = vperm.xlu0 %1677, %v1513
      %v1679 = vpop.permute.xlu0 %1678
      %v1681 = vadd.f32 %v1672, %v1679
      %v1682 = vadd.f32 %v1674, %v1679
      %v1683 = vxor.u32 %v1681, 2147483648
      %v1684 = vxor.u32 %v1682, 2147483648
      %v1685 = vmul.f32 %v1683, 1.442695
      %v1686 = vpow.pop %v1685
      %v1687 = vmul.f32 %v1684, 1.442695
      %v1688 = vpow.pop %v1687
      %v1689 = vadd.f32 %v1686, 1.0
      %v1690 = vadd.f32 %v1688, 1.0
      %v1691 = vrcp.pop %v1689
      %v1692 = vmul.f32 1.0, %v1691
      %v1693 = vrcp.pop %v1690
      %v1694 = vmul.f32 1.0, %v1693
      %v1695 = vmul.f32 %v1681, %v1692
      %v1696 = vmul.f32 %v1682, %v1694
      %1697 = vst [vmem:[%s278] sm:$0xff] %v1695
      %1698 = vst [vmem:[%s278 + $0x8] sm:$0xff] %v1696
      %p1699 = scmp.lt.s32.totalorder %s18, 1
      %s1700 = scalar_select %p1699, %s18, 1
      %s1701 = smul.addr %s1700, 2
      %s1702 = smul.addr %s1701, 8
      %s1703 = scalar_lea.vmem %s7, %s1702
      // Predicated region
      $region49: #{c3_forward_pallas.1} parent=47 // pred_check
        %p1704 = pneg %p188
      $region50: #{c3_forward_pallas.1} parent=47 // pred_check_branch
        %1706 = sbr.rel (%p1704) target = $region52
      $region51: #{c3_forward_pallas.1} parent=47 // pred_region
        _
      $region52: #{c3_forward_pallas.1} parent=47 // pred_fallthru
        _
    $region48: #{c3_forward_pallas.1} parent=5 // pred_fallthru
      _
    %p1707 = scmp.le.s32.totalorder 2, %s13
    // Predicated region
    $region53: #{c3_forward_pallas.1} parent=5 // pred_check
      %p1708 = pneg %p1707
    $region54: #{c3_forward_pallas.1} parent=5 // pred_check_branch
      %1710 = sbr.rel (%p1708) target = $region56
    $region55: #{c3_forward_pallas.1} parent=5 // pred_region
      %s1711 = ssub.s32 %s13, 2
      // Predicated region
      $region57: #{c3_forward_pallas.1} parent=55 // pred_check
        %p1712 = pneg %p194
      $region58: #{c3_forward_pallas.1} parent=55 // pred_check_branch
        %1714 = sbr.rel (%p1712) target = $region60
      $region59: #{c3_forward_pallas.1} parent=55 // pred_region
        %p1715 = scmp.lt.s32.totalorder %s19, 1
        %s1716 = scalar_select %p1715, %s19, 1
        %s1717 = smul.addr %s1716, 2
        %s1718 = smul.addr %s1717, 8
        %s1719 = scalar_lea.vmem %s7, %s1718
      $region60: #{c3_forward_pallas.1} parent=55 // pred_fallthru
        _
    $region56: #{c3_forward_pallas.1} parent=5 // pred_fallthru
      _
  $region6: #{c3_forward_pallas.1} parent=0 // loop_footer
    %s17 = sadd.s32 1, %s13
  $region7: #{c3_forward_pallas.1} parent=0 // loop_footer_branch
    %12 = sbr.rel target = $region3
  $region8: #{c3_forward_pallas.1} parent=0 // loop_exit
    _

</llo_original>
